<compile_context>
chip_gen: v6e
topology: v6e:2x2x1
jax: 0.10.0
libtpu: 0.0.40
codegen_flags: <defaults>
</compile_context>

<pallas_src>
import math
from functools import partial

import jax
import jax.numpy as jnp
from jax.experimental import pallas as pl
from jax.experimental.pallas import tpu as pltpu


def _round_up(v, m):
    return (v + m - 1) // m * m


def _vmem_capacity_bytes():
    """Physical VMEM of the attached TPU generation (64 MiB v7x, 128 MiB v5e/v6e)."""
    try:
        cap = int(pltpu.get_tpu_info().vmem_capacity_bytes)
        if cap > 0:
            return max(cap, 32 * 2 ** 20)
    except Exception:
        pass
    return 64 * 2 ** 20  # conservative (v7x-sized) fallback


# --------------------------------------------------------------------------- #
# Fused all-layers VMEM-resident kernel                                        #
# --------------------------------------------------------------------------- #
def _make_fused_kernel(num_layers, feat_p):
    """All GraphConv layers fused; adjacency and activations never leave VMEM."""

    def kernel(*refs):
        # refs = (adj_w, dsrc, ddst, x, w0, b0, w1, b1, ..., out)
        adj_ref, dsrc_ref, ddst_ref, x_ref = refs[:4]
        out_ref = refs[-1]
        wb = refs[4:-1]

        adj = adj_ref[...]            # (Np, Np)  bf16  A * edge_weight (un-normalized)
        dsrc = dsrc_ref[...]          # (Np, 1)   bf16  D_out^{-1/2}
        ddst = ddst_ref[...]          # (Np, 1)   f32   D_in^{-1/2}
        h = x_ref[...]                # (Np, F0p) bf16
        for l in range(num_layers):
            w = wb[2 * l][...]        # (Flp, F(l+1)p) f32
            b = wb[2 * l + 1][...]    # (1,   F(l+1)p) f32
            hs = h * dsrc             # source-side normalization (stays bf16)
            if feat_p[l + 1] < feat_p[l]:
                # adj @ (h @ W): contract the O(Np^2) aggregation against the
                # smaller padded feature width.
                t = jnp.dot(hs, w, preferred_element_type=jnp.float32)
                agg = jnp.dot(adj, t.astype(jnp.bfloat16),
                              preferred_element_type=jnp.float32)
                z = agg * ddst + b
            else:
                # (adj @ h) @ W: bf16 MXU aggregation with f32 accumulation; the
                # small weight matmul stays in f32 (no second quantization).
                agg = jnp.dot(adj, hs, preferred_element_type=jnp.float32)
                agg = agg * ddst      # destination-side normalization (f32, exact)
                z = jnp.dot(agg, w, preferred_element_type=jnp.float32) + b
            if l < num_layers - 1:
                # ReLU on all but the last GraphConv; dropout is identity at inference.
                h = jnp.maximum(z, 0.0).astype(jnp.bfloat16)
            else:
                out_ref[...] = z      # lane-dense f32 store

    return kernel


# --------------------------------------------------------------------------- #
# Row-tiled per-layer kernel (large graphs / v7x dual-TensorCore path)         #
# --------------------------------------------------------------------------- #
def _make_layer_kernel(apply_relu):
    def kernel(adj_ref, dsrc_ref, ddst_ref, h_ref, w_ref, b_ref, o_ref):
        a = adj_ref[...] * dsrc_ref[...]                      # (tm, Np) bf16
        agg = jnp.dot(a, h_ref[...], preferred_element_type=jnp.float32)
        agg = agg * ddst_ref[...]                             # dest normalization
        z = jnp.dot(agg, w_ref[...], preferred_element_type=jnp.float32) + b_ref[...]
        if apply_relu:
            z = jnp.maximum(z, 0.0)
        o_ref[...] = z.astype(o_ref.dtype)

    return kernel


def _tiled_layer(adj_wp, dsrc_row, ddst_col, h, w, b, *,
                 apply_relu, out_dtype, tm, vmem_cap):
    n_p = adj_wp.shape[0]
    fin_p, fout_p = w.shape
    out_bytes = jnp.dtype(out_dtype).itemsize

    need = (2 * tm * n_p * 2                # adjacency row panels (double-buffered, bf16)
            + n_p * 2                       # dsrc row
            + 2 * tm * 512                  # ddst tiles (lane-padded f32, double-buffered)
            + n_p * fin_p * 2               # resident previous-layer activations
            + fin_p * fout_p * 4 + fout_p * 4
            + 2 * tm * fout_p * out_bytes   # output tiles (double-buffered)
            + tm * n_p * 2                  # adj*dsrc temporary
            + 2 * tm * max(fin_p, fout_p) * 4)  # agg / z temporaries
    vmem_limit = int(min(max(need * 1.25, 32 * 2 ** 20), 0.95 * vmem_cap))

    flops = 2 * n_p * n_p * fin_p + 2 * n_p * fin_p * fout_p
    bytes_accessed = int(n_p * n_p * 2 + n_p * fin_p * 2 + fin_p * fout_p * 4
                         + n_p * fout_p * out_bytes + n_p * 8)

    return pl.pallas_call(
        _make_layer_kernel(apply_relu),
        grid=(n_p // tm,),
        in_specs=[
            pl.BlockSpec((tm, n_p), lambda r: (r, 0)),        # adj row panel (streamed)
            pl.BlockSpec((1, n_p), lambda r: (0, 0)),         # dsrc (VMEM-resident)
            pl.BlockSpec((tm, 1), lambda r: (r, 0)),          # ddst row tile
            pl.BlockSpec((n_p, fin_p), lambda r: (0, 0)),     # h (VMEM-resident)
            pl.BlockSpec((fin_p, fout_p), lambda r: (0, 0)),  # W (VMEM-resident)
            pl.BlockSpec((1, fout_p), lambda r: (0, 0)),      # bias (VMEM-resident)
        ],
        out_specs=pl.BlockSpec((tm, fout_p), lambda r: (r, 0)),
        out_shape=jax.ShapeDtypeStruct((n_p, fout_p), out_dtype),
        compiler_params=pltpu.CompilerParams(
            dimension_semantics=("parallel",),                # both TCs on v7x
            vmem_limit_bytes=vmem_limit),
        cost_estimate=pl.CostEstimate(flops=flops, transcendentals=0,
                                      bytes_accessed=bytes_accessed),
    )(adj_wp, dsrc_row, ddst_col, h, w, b)


# --------------------------------------------------------------------------- #
# Wrapper                                                                      #
# --------------------------------------------------------------------------- #
@partial(jax.jit, static_argnames=("force_tiled", "tm"))
def gcn_forward(adj, edge_weight, x, weights, biases, force_tiled=False, tm=512):
    """adj: (N, N) 0/1 f32 with adj[i, j] = 1 iff edge j -> i.
       edge_weight: (N, N) f32 dense per-edge weights (off-edge entries ignored).
       x: (N, F0) f32.  weights[l]: (F_l, F_{l+1}) f32.  biases[l]: (F_{l+1},) f32."""
    n = x.shape[0]
    num_layers = len(weights)
    n_classes = weights[-1].shape[1]
    vmem_cap = _vmem_capacity_bytes()

    # ---- structural degrees (clamp(min=1)) + rsqrt, shared by every layer ----
    deg_in = jnp.maximum(jnp.sum(adj, axis=1), 1.0)    # destination in-degree
    deg_out = jnp.maximum(jnp.sum(adj, axis=0), 1.0)   # source out-degree
    ddst = jax.lax.rsqrt(deg_in)                       # D_in^{-1/2}
    dsrc = jax.lax.rsqrt(deg_out)                      # D_out^{-1/2}

    # ---- zero-pad to lane-dense shapes (exact: padded rows/cols are zero) ----
    n_p = _round_up(n, 128)
    feat_dims = [x.shape[1]] + [w.shape[1] for w in weights]
    feat_p = [_round_up(f, 128) for f in feat_dims]

    # Weighted adjacency cast straight to bf16 (one fused elementwise pass); the
    # symmetric normalization is applied inside the kernel from the two rsqrt
    # vectors, so no f32 NxN normalized temporary is materialized here.
    adj_wp = jnp.zeros((n_p, n_p), jnp.bfloat16).at[:n, :n].set(
        (adj * edge_weight).astype(jnp.bfloat16))
    x_p = jnp.zeros((n_p, feat_p[0]), jnp.bfloat16).at[:n, :x.shape[1]].set(
        x.astype(jnp.bfloat16))
    dsrc_col = jnp.zeros((n_p, 1), jnp.bfloat16).at[:n, 0].set(
        dsrc.astype(jnp.bfloat16))
    ddst_col = jnp.zeros((n_p, 1), jnp.float32).at[:n, 0].set(ddst)

    w_p, b_p = [], []
    for l in range(num_layers):
        w, b = weights[l], biases[l]
        w_p.append(jnp.zeros((feat_p[l], feat_p[l + 1]), jnp.float32)
                   .at[:w.shape[0], :w.shape[1]].set(w))
        b_p.append(jnp.zeros((1, feat_p[l + 1]), jnp.float32)
                   .at[0, :b.shape[0]].set(b))

    # ---- resident-vs-tiled dispatch (generation-aware VMEM budget) ----
    fmax = max(feat_p)
    resident_bytes = (n_p * n_p * 2 + n_p * feat_p[0] * 2
                      + n_p * 256 + n_p * 512
                      + sum(feat_p[l] * feat_p[l + 1] * 4 + feat_p[l + 1] * 4
                            for l in range(num_layers))
                      + n_p * feat_p[-1] * 4
                      + 4 * n_p * fmax * 4)             # kernel temporaries
    use_tiled = force_tiled or (resident_bytes * 1.25 > 0.75 * vmem_cap)

    if use_tiled:
        # One pallas_call per layer: destination rows tiled ('parallel' -> shards
        # across both v7x TensorCores), weights / bias / h / dsrc stay VMEM-resident
        # via constant index_maps, adjacency row panels stream from HBM.
        tm_eff = max(128, (min(tm, n_p) // 128) * 128)
        if n_p % tm_eff != 0:
            tm_eff = 128
        dsrc_row = jnp.zeros((1, n_p), jnp.bfloat16).at[0, :n].set(
            dsrc.astype(jnp.bfloat16))
        h = x_p
        for l in range(num_layers):
            last = l == num_layers - 1
            h = _tiled_layer(adj_wp, dsrc_row, ddst_col, h, w_p[l], b_p[l],
                             apply_relu=not last,
                             out_dtype=jnp.float32 if last else jnp.bfloat16,
                             tm=tm_eff, vmem_cap=vmem_cap)
        out_p = h
    else:
        # Fully fused path: adjacency DMA'd once; all intermediates stay in VMEM.
        wb_args = []
        for l in range(num_layers):
            wb_args += [w_p[l], b_p[l]]

        flops = 0
        bytes_accessed = (adj_wp.size * 2 + x_p.size * 2
                          + n_p * feat_p[-1] * 4 + n_p * 8)
        for l in range(num_layers):
            fin, fout = feat_p[l], feat_p[l + 1]
            if fout < fin:
                flops += 2 * n_p * fin * fout + 2 * n_p * n_p * fout
            else:
                flops += 2 * n_p * n_p * fin + 2 * n_p * fin * fout
            bytes_accessed += fin * fout * 4 + fout * 4

        vmem_limit = int(min(max(resident_bytes * 1.25, 32 * 2 ** 20),
                             0.95 * vmem_cap))

        out_p = pl.pallas_call(
            _make_fused_kernel(num_layers, tuple(feat_p)),
            out_shape=jax.ShapeDtypeStruct((n_p, feat_p[-1]), jnp.float32),
            in_specs=[pl.BlockSpec(memory_space=pltpu.VMEM)] * (4 + 2 * num_layers),
            out_specs=pl.BlockSpec(memory_space=pltpu.VMEM),
            compiler_params=pltpu.CompilerParams(vmem_limit_bytes=vmem_limit),
            cost_estimate=pl.CostEstimate(flops=flops, transcendentals=0,
                                          bytes_accessed=int(bytes_accessed)),
        )(adj_wp, dsrc_col, ddst_col, x_p, *wb_args)

    return out_p[:n, :n_classes]


def _reference_forward(adj, edge_weight, x, weights, biases):
    """Pure-JAX f32 reference of the DGL GraphConv(norm='both') stack."""
    deg_in = jnp.maximum(jnp.sum(adj, axis=1), 1.0)
    deg_out = jnp.maximum(jnp.sum(adj, axis=0), 1.0)
    adj_norm = ((deg_in ** -0.5)[:, None] * (adj * edge_weight)
                * (deg_out ** -0.5)[None, :])
    h = x
    for l, (w, b) in enumerate(zip(weights, biases)):
        h = adj_norm @ h @ w + b
        if l < len(weights) - 1:
            h = jnp.maximum(h, 0.0)
    return h


if __name__ == "__main__":
    def make_problem(key, n, in_feats, n_hidden, n_classes, n_layers):
        dims = [in_feats] + [n_hidden] * n_layers + [n_classes]
        num_conv = len(dims) - 1
        keys = jax.random.split(key, 3 + 2 * num_conv)
        # Random sparse-ish directed graph as dense adjacency (edge j -> i at adj[i, j]);
        # some nodes end up with zero degree, exercising the clamp(min=1) path.
        adj = (jax.random.uniform(keys[0], (n, n)) < 0.05).astype(jnp.float32)
        edge_weight = jax.random.uniform(keys[1], (n, n), minval=0.1, maxval=1.0)
        x = jax.random.normal(keys[2], (n, in_feats), dtype=jnp.float32)
        weights, biases = [], []
        for l in range(num_conv):
            kw, kb = keys[3 + 2 * l], keys[4 + 2 * l]
            weights.append(jax.random.normal(kw, (dims[l], dims[l + 1]), jnp.float32)
                           / jnp.sqrt(jnp.float32(dims[l])))
            biases.append(jax.random.normal(kb, (dims[l + 1],), jnp.float32) * 0.01)
        return adj, edge_weight, x, weights, biases

    key = jax.random.PRNGKey(0)
    k1, k2, k3 = jax.random.split(key, 3)

    # 1) Fused VMEM-resident path (the default on v5e/v6e and small graphs).
    adj, ew, x, ws, bs = make_problem(k1, 128, 16, 32, 8, 2)
    out = jax.block_until_ready(gcn_forward(adj, ew, x, ws, bs))
    ref = _reference_forward(adj, ew, x, ws, bs)
    assert out.shape == (128, 8)
    assert jnp.allclose(out, ref, atol=5e-2, rtol=5e-2), \
        float(jnp.max(jnp.abs(out - ref)))

    # 2) Row-tiled 'parallel' path (what large graphs / v7x dual-TC dispatch to),
    #    forced here at a small size so it is exercised and checked as well.
    adj, ew, x, ws, bs = make_problem(k2, 256, 16, 32, 8, 2)
    out = jax.block_until_ready(
        gcn_forward(adj, ew, x, ws, bs, force_tiled=True, tm=128))
    ref = _reference_forward(adj, ew, x, ws, bs)
    assert out.shape == (256, 8)
    assert jnp.allclose(out, ref, atol=5e-2, rtol=5e-2), \
        float(jnp.max(jnp.abs(out - ref)))

    # 3) Fused path with shrinking padded widths -> exercises the adj@(h@W) reorder.
    adj, ew, x, ws, bs = make_problem(k3, 128, 16, 160, 8, 2)
    out = jax.block_until_ready(gcn_forward(adj, ew, x, ws, bs))
    ref = _reference_forward(adj, ew, x, ws, bs)
    assert out.shape == (128, 8)
    assert jnp.allclose(out, ref, atol=5e-2, rtol=5e-2), \
        float(jnp.max(jnp.abs(out - ref)))

    print("KERNEL_OK")
</pallas_src>

<mosaic_0001>
module attributes {stable_mosaic.version = 11 : i64} {
  func.func @kernel(%arg0: memref<128x128xbf16, #tpu.memory_space<vmem>>, %arg1: memref<128x1xbf16, #tpu.memory_space<vmem>>, %arg2: memref<128x1xf32, #tpu.memory_space<vmem>>, %arg3: memref<128x128xbf16, #tpu.memory_space<vmem>>, %arg4: memref<128x128xf32, #tpu.memory_space<vmem>>, %arg5: memref<1x128xf32, #tpu.memory_space<vmem>>, %arg6: memref<128x128xf32, #tpu.memory_space<vmem>>, %arg7: memref<1x128xf32, #tpu.memory_space<vmem>>, %arg8: memref<128x128xf32, #tpu.memory_space<vmem>>, %arg9: memref<1x128xf32, #tpu.memory_space<vmem>>, %arg10: memref<128x128xf32, #tpu.memory_space<vmem>>) attributes {dimension_semantics = [], scalar_prefetch = 0 : i64, scratch_operands = 0 : i64, tpu.core_type = #tpu.core_type<tc>} {
    %c0 = arith.constant 0 : index
    %c0_0 = arith.constant 0 : index
    %0 = vector.load %arg0[%c0, %c0_0] : memref<128x128xbf16, #tpu.memory_space<vmem>>, vector<128x128xbf16>
    %c0_1 = arith.constant 0 : index
    %c0_2 = arith.constant 0 : index
    %1 = vector.load %arg1[%c0_1, %c0_2] : memref<128x1xbf16, #tpu.memory_space<vmem>>, vector<128x1xbf16>
    %c0_3 = arith.constant 0 : index
    %c0_4 = arith.constant 0 : index
    %2 = vector.load %arg2[%c0_3, %c0_4] : memref<128x1xf32, #tpu.memory_space<vmem>>, vector<128x1xf32>
    %c0_5 = arith.constant 0 : index
    %c0_6 = arith.constant 0 : index
    %3 = vector.load %arg3[%c0_5, %c0_6] : memref<128x128xbf16, #tpu.memory_space<vmem>>, vector<128x128xbf16>
    %c0_7 = arith.constant 0 : index
    %c0_8 = arith.constant 0 : index
    %4 = vector.load %arg4[%c0_7, %c0_8] : memref<128x128xf32, #tpu.memory_space<vmem>>, vector<128x128xf32>
    %c0_9 = arith.constant 0 : index
    %c0_10 = arith.constant 0 : index
    %5 = vector.load %arg5[%c0_9, %c0_10] : memref<1x128xf32, #tpu.memory_space<vmem>>, vector<1x128xf32>
    %6 = vector.broadcast %1 : vector<128x1xbf16> to vector<128x128xbf16>
    %7 = arith.mulf %3, %6 : vector<128x128xbf16>
    %cst = arith.constant dense<0.000000e+00> : vector<128x128xf32>
    %8 = tpu.matmul %0, %7, %cst {dimension_numbers = #tpu.dot_dimension_numbers<[1], [0], [0], [1], [0, 0, 1, 1], [], []>} : vector<128x128xbf16>, vector<128x128xbf16>, vector<128x128xf32> -> vector<128x128xf32>
    %9 = vector.broadcast %2 : vector<128x1xf32> to vector<128x128xf32>
    %10 = arith.mulf %8, %9 : vector<128x128xf32>
    %cst_11 = arith.constant dense<0.000000e+00> : vector<128x128xf32>
    %11 = tpu.matmul %10, %4, %cst_11 {dimension_numbers = #tpu.dot_dimension_numbers<[1], [0], [0], [1], [0, 0, 1, 1], [], []>} : vector<128x128xf32>, vector<128x128xf32>, vector<128x128xf32> -> vector<128x128xf32>
    %12 = vector.broadcast %5 : vector<1x128xf32> to vector<128x128xf32>
    %13 = arith.addf %11, %12 : vector<128x128xf32>
    %cst_12 = arith.constant 0.000000e+00 : f32
    %14 = vector.broadcast %cst_12 : f32 to vector<128x128xf32>
    %15 = arith.maximumf %13, %14 : vector<128x128xf32>
    %16 = arith.truncf %15 : vector<128x128xf32> to vector<128x128xbf16>
    %c0_13 = arith.constant 0 : index
    %c0_14 = arith.constant 0 : index
    %17 = vector.load %arg6[%c0_13, %c0_14] : memref<128x128xf32, #tpu.memory_space<vmem>>, vector<128x128xf32>
    %c0_15 = arith.constant 0 : index
    %c0_16 = arith.constant 0 : index
    %18 = vector.load %arg7[%c0_15, %c0_16] : memref<1x128xf32, #tpu.memory_space<vmem>>, vector<1x128xf32>
    %19 = vector.broadcast %1 : vector<128x1xbf16> to vector<128x128xbf16>
    %20 = arith.mulf %16, %19 : vector<128x128xbf16>
    %cst_17 = arith.constant dense<0.000000e+00> : vector<128x128xf32>
    %21 = tpu.matmul %0, %20, %cst_17 {dimension_numbers = #tpu.dot_dimension_numbers<[1], [0], [0], [1], [0, 0, 1, 1], [], []>} : vector<128x128xbf16>, vector<128x128xbf16>, vector<128x128xf32> -> vector<128x128xf32>
    %22 = vector.broadcast %2 : vector<128x1xf32> to vector<128x128xf32>
    %23 = arith.mulf %21, %22 : vector<128x128xf32>
    %cst_18 = arith.constant dense<0.000000e+00> : vector<128x128xf32>
    %24 = tpu.matmul %23, %17, %cst_18 {dimension_numbers = #tpu.dot_dimension_numbers<[1], [0], [0], [1], [0, 0, 1, 1], [], []>} : vector<128x128xf32>, vector<128x128xf32>, vector<128x128xf32> -> vector<128x128xf32>
    %25 = vector.broadcast %18 : vector<1x128xf32> to vector<128x128xf32>
    %26 = arith.addf %24, %25 : vector<128x128xf32>
    %cst_19 = arith.constant 0.000000e+00 : f32
    %27 = vector.broadcast %cst_19 : f32 to vector<128x128xf32>
    %28 = arith.maximumf %26, %27 : vector<128x128xf32>
    %29 = arith.truncf %28 : vector<128x128xf32> to vector<128x128xbf16>
    %c0_20 = arith.constant 0 : index
    %c0_21 = arith.constant 0 : index
    %30 = vector.load %arg8[%c0_20, %c0_21] : memref<128x128xf32, #tpu.memory_space<vmem>>, vector<128x128xf32>
    %c0_22 = arith.constant 0 : index
    %c0_23 = arith.constant 0 : index
    %31 = vector.load %arg9[%c0_22, %c0_23] : memref<1x128xf32, #tpu.memory_space<vmem>>, vector<1x128xf32>
    %32 = vector.broadcast %1 : vector<128x1xbf16> to vector<128x128xbf16>
    %33 = arith.mulf %29, %32 : vector<128x128xbf16>
    %cst_24 = arith.constant dense<0.000000e+00> : vector<128x128xf32>
    %34 = tpu.matmul %0, %33, %cst_24 {dimension_numbers = #tpu.dot_dimension_numbers<[1], [0], [0], [1], [0, 0, 1, 1], [], []>} : vector<128x128xbf16>, vector<128x128xbf16>, vector<128x128xf32> -> vector<128x128xf32>
    %35 = vector.broadcast %2 : vector<128x1xf32> to vector<128x128xf32>
    %36 = arith.mulf %34, %35 : vector<128x128xf32>
    %cst_25 = arith.constant dense<0.000000e+00> : vector<128x128xf32>
    %37 = tpu.matmul %36, %30, %cst_25 {dimension_numbers = #tpu.dot_dimension_numbers<[1], [0], [0], [1], [0, 0, 1, 1], [], []>} : vector<128x128xf32>, vector<128x128xf32>, vector<128x128xf32> -> vector<128x128xf32>
    %38 = vector.broadcast %31 : vector<1x128xf32> to vector<128x128xf32>
    %39 = arith.addf %37, %38 : vector<128x128xf32>
    %c0_26 = arith.constant 0 : index
    %c0_27 = arith.constant 0 : index
    %40 = vector.load %arg10[%c0_26, %c0_27] : memref<128x128xf32, #tpu.memory_space<vmem>>, vector<128x128xf32>
    tpu.vector_store %arg10[%c0_26, %c0_27], %39 {strides = array<i32>} : memref<128x128xf32, #tpu.memory_space<vmem>>, vector<128x128xf32>,
    return
  }
}

</mosaic_0001>

<llo_original>
// kernel: gcn_forward.1
$region0: #{gcn_forward.1}
  #allocation0 [shape = 'u32[]', space=smem, size = 0x4, offset = 0x4, fixed_abs, tag = 'smem constant byte address 0x4 - core index']
  #allocation1 [shape = 'u32[144,128]{1,0:T(1,128)}', space=vmem, size = 0x12000, scoped, tag = 'internal scratch']
  %s0 = inlined_call_operand.vmem [shape: bf16[128,128], index: 0, kind: input, shape index: {}]
  %s1 = inlined_call_operand.vmem [shape: bf16[128,1], index: 1, kind: input, shape index: {}]
  %s2 = inlined_call_operand.vmem [shape: f32[128,1], index: 2, kind: input, shape index: {}]
  %s3 = inlined_call_operand.vmem [shape: bf16[128,128], index: 3, kind: input, shape index: {}]
  %s4 = inlined_call_operand.vmem [shape: f32[128,128], index: 4, kind: input, shape index: {}]
  %s5 = inlined_call_operand.vmem [shape: f32[1,128], index: 5, kind: input, shape index: {}]
  %s6 = inlined_call_operand.vmem [shape: f32[128,128], index: 6, kind: input, shape index: {}]
  %s7 = inlined_call_operand.vmem [shape: f32[1,128], index: 7, kind: input, shape index: {}]
  %s8 = inlined_call_operand.vmem [shape: f32[128,128], index: 8, kind: input, shape index: {}]
  %s9 = inlined_call_operand.vmem [shape: f32[1,128], index: 9, kind: input, shape index: {}]
  %s10 = inlined_call_operand.vmem [shape: f32[128,128], index: 10, kind: output, shape index: {}]
  %s11 = sld [smem:[#allocation0]]
  $region50: #{gcn_forward.1} parent=0
    _
  %s13 = ssub.s32 1, %s11
  %s14 = scalar_select 0, %s13, %s11
  // Predicated region
  $region2: #{gcn_forward.1} parent=0 // pred_check
    _
  $region3: #{gcn_forward.1} parent=0 // pred_check_branch
    %16 = sbr.rel (0) target = $region5
  $region4: #{gcn_forward.1} parent=0 // pred_region
    _
  $region5: #{gcn_forward.1} parent=0 // pred_fallthru
    _
  // Predicated region
  $region6: #{gcn_forward.1} parent=0 // pred_check
    _
  $region7: #{gcn_forward.1} parent=0 // pred_check_branch
    %18 = sbr.rel (0) target = $region9
  $region8: #{gcn_forward.1} parent=0 // pred_region
    _
  $region9: #{gcn_forward.1} parent=0 // pred_fallthru
    _
  // Predicated region
  $region10: #{gcn_forward.1} parent=0 // pred_check
    _
  $region11: #{gcn_forward.1} parent=0 // pred_check_branch
    %20 = sbr.rel (0) target = $region13
  $region12: #{gcn_forward.1} parent=0 // pred_region
    _
  $region13: #{gcn_forward.1} parent=0 // pred_fallthru
    _
  // Predicated region
  $region14: #{gcn_forward.1} parent=0 // pred_check
    _
  $region15: #{gcn_forward.1} parent=0 // pred_check_branch
    %22 = sbr.rel (0) target = $region17
  $region16: #{gcn_forward.1} parent=0 // pred_region
    _
  $region17: #{gcn_forward.1} parent=0 // pred_fallthru
    _
  // Predicated region
  $region18: #{gcn_forward.1} parent=0 // pred_check
    _
  $region19: #{gcn_forward.1} parent=0 // pred_check_branch
    %24 = sbr.rel (0) target = $region21
  $region20: #{gcn_forward.1} parent=0 // pred_region
    _
  $region21: #{gcn_forward.1} parent=0 // pred_fallthru
    _
  // Predicated region
  $region22: #{gcn_forward.1} parent=0 // pred_check
    _
  $region23: #{gcn_forward.1} parent=0 // pred_check_branch
    %26 = sbr.rel (0) target = $region25
  $region24: #{gcn_forward.1} parent=0 // pred_region
    _
  $region25: #{gcn_forward.1} parent=0 // pred_fallthru
    _
  // Predicated region
  $region26: #{gcn_forward.1} parent=0 // pred_check
    _
  $region27: #{gcn_forward.1} parent=0 // pred_check_branch
    %28 = sbr.rel (0) target = $region29
  $region28: #{gcn_forward.1} parent=0 // pred_region
    _
  $region29: #{gcn_forward.1} parent=0 // pred_fallthru
    _
  // Predicated region
  $region30: #{gcn_forward.1} parent=0 // pred_check
    _
  $region31: #{gcn_forward.1} parent=0 // pred_check_branch
    %30 = sbr.rel (0) target = $region33
  $region32: #{gcn_forward.1} parent=0 // pred_region
    _
  $region33: #{gcn_forward.1} parent=0 // pred_fallthru
    _
  // Predicated region
  $region34: #{gcn_forward.1} parent=0 // pred_check
    _
  $region35: #{gcn_forward.1} parent=0 // pred_check_branch
    %32 = sbr.rel (0) target = $region37
  $region36: #{gcn_forward.1} parent=0 // pred_region
    _
  $region37: #{gcn_forward.1} parent=0 // pred_fallthru
    _
  // Predicated region
  $region38: #{gcn_forward.1} parent=0 // pred_check
    _
  $region39: #{gcn_forward.1} parent=0 // pred_check_branch
    %34 = sbr.rel (0) target = $region41
  $region40: #{gcn_forward.1} parent=0 // pred_region
    _
  $region41: #{gcn_forward.1} parent=0 // pred_fallthru
    _
  %v36 = vld [vmem:[%s0] sm:$0xf]
  %v37 = vld [vmem:[%s0 + $0x4] sm:$0xf]
  %v38 = vld [vmem:[%s0 + $0x8] sm:$0xf]
  %v39 = vld [vmem:[%s0 + $0xc] sm:$0xf]
  %v40 = vld [vmem:[%s0 + $0x10] sm:$0xf]
  %v41 = vld [vmem:[%s0 + $0x14] sm:$0xf]
  %v42 = vld [vmem:[%s0 + $0x18] sm:$0xf]
  %v43 = vld [vmem:[%s0 + $0x1c] sm:$0xf]
  %v44 = vld [vmem:[%s0 + $0x20] sm:$0xf]
  %v45 = vld [vmem:[%s0 + $0x24] sm:$0xf]
  %v46 = vld [vmem:[%s0 + $0x28] sm:$0xf]
  %v47 = vld [vmem:[%s0 + $0x2c] sm:$0xf]
  %v48 = vld [vmem:[%s0 + $0x30] sm:$0xf]
  %v49 = vld [vmem:[%s0 + $0x34] sm:$0xf]
  %v50 = vld [vmem:[%s0 + $0x38] sm:$0xf]
  %v51 = vld [vmem:[%s0 + $0x3c] sm:$0xf]
  %v52 = vld [vmem:[%s1] sm:$0xf]
  %v53 = vld [vmem:[%s1 + $0x4] sm:$0xf]
  %v54 = vld [vmem:[%s1 + $0x8] sm:$0xf]
  %v55 = vld [vmem:[%s1 + $0xc] sm:$0xf]
  %v56 = vld [vmem:[%s1 + $0x10] sm:$0xf]
  %v57 = vld [vmem:[%s1 + $0x14] sm:$0xf]
  %v58 = vld [vmem:[%s1 + $0x18] sm:$0xf]
  %v59 = vld [vmem:[%s1 + $0x1c] sm:$0xf]
  %v60 = vld [vmem:[%s1 + $0x20] sm:$0xf]
  %v61 = vld [vmem:[%s1 + $0x24] sm:$0xf]
  %v62 = vld [vmem:[%s1 + $0x28] sm:$0xf]
  %v63 = vld [vmem:[%s1 + $0x2c] sm:$0xf]
  %v64 = vld [vmem:[%s1 + $0x30] sm:$0xf]
  %v65 = vld [vmem:[%s1 + $0x34] sm:$0xf]
  %v66 = vld [vmem:[%s1 + $0x38] sm:$0xf]
  %v67 = vld [vmem:[%s1 + $0x3c] sm:$0xf]
  %v68 = vld [vmem:[%s2] sm:$0xff]
  %v69 = vld [vmem:[%s2 + $0x8] sm:$0xff]
  %v70 = vld [vmem:[%s2 + $0x10] sm:$0xff]
  %v71 = vld [vmem:[%s2 + $0x18] sm:$0xff]
  %v72 = vld [vmem:[%s2 + $0x20] sm:$0xff]
  %v73 = vld [vmem:[%s2 + $0x28] sm:$0xff]
  %v74 = vld [vmem:[%s2 + $0x30] sm:$0xff]
  %v75 = vld [vmem:[%s2 + $0x38] sm:$0xff]
  %v76 = vld [vmem:[%s2 + $0x40] sm:$0xff]
  %v77 = vld [vmem:[%s2 + $0x48] sm:$0xff]
  %v78 = vld [vmem:[%s2 + $0x50] sm:$0xff]
  %v79 = vld [vmem:[%s2 + $0x58] sm:$0xff]
  %v80 = vld [vmem:[%s2 + $0x60] sm:$0xff]
  %v81 = vld [vmem:[%s2 + $0x68] sm:$0xff]
  %v82 = vld [vmem:[%s2 + $0x70] sm:$0xff]
  %v83 = vld [vmem:[%s2 + $0x78] sm:$0xff]
  %v84 = vld [vmem:[%s3] sm:$0xf]
  %v85 = vld [vmem:[%s3 + $0x4] sm:$0xf]
  %v86 = vld [vmem:[%s3 + $0x8] sm:$0xf]
  %v87 = vld [vmem:[%s3 + $0xc] sm:$0xf]
  %v88 = vld [vmem:[%s3 + $0x10] sm:$0xf]
  %v89 = vld [vmem:[%s3 + $0x14] sm:$0xf]
  %v90 = vld [vmem:[%s3 + $0x18] sm:$0xf]
  %v91 = vld [vmem:[%s3 + $0x1c] sm:$0xf]
  %v92 = vld [vmem:[%s3 + $0x20] sm:$0xf]
  %v93 = vld [vmem:[%s3 + $0x24] sm:$0xf]
  %v94 = vld [vmem:[%s3 + $0x28] sm:$0xf]
  %v95 = vld [vmem:[%s3 + $0x2c] sm:$0xf]
  %v96 = vld [vmem:[%s3 + $0x30] sm:$0xf]
  %v97 = vld [vmem:[%s3 + $0x34] sm:$0xf]
  %v98 = vld [vmem:[%s3 + $0x38] sm:$0xf]
  %v99 = vld [vmem:[%s3 + $0x3c] sm:$0xf]
  %v100 = vld [vmem:[%s4] sm:$0xff]
  %v101 = vld [vmem:[%s4 + $0x8] sm:$0xff]
  %v102 = vld [vmem:[%s4 + $0x10] sm:$0xff]
  %v103 = vld [vmem:[%s4 + $0x18] sm:$0xff]
  %v104 = vld [vmem:[%s4 + $0x20] sm:$0xff]
  %v105 = vld [vmem:[%s4 + $0x28] sm:$0xff]
  %v106 = vld [vmem:[%s4 + $0x30] sm:$0xff]
  %v107 = vld [vmem:[%s4 + $0x38] sm:$0xff]
  %v108 = vld [vmem:[%s4 + $0x40] sm:$0xff]
  %v109 = vld [vmem:[%s4 + $0x48] sm:$0xff]
  %v110 = vld [vmem:[%s4 + $0x50] sm:$0xff]
  %v111 = vld [vmem:[%s4 + $0x58] sm:$0xff]
  %v112 = vld [vmem:[%s4 + $0x60] sm:$0xff]
  %v113 = vld [vmem:[%s4 + $0x68] sm:$0xff]
  %v114 = vld [vmem:[%s4 + $0x70] sm:$0xff]
  %v115 = vld [vmem:[%s4 + $0x78] sm:$0xff]
  %v116 = vld [vmem:[%s5] sm:$0x1]
  %118 = vset.pattern.permute.xlu0 0
  %119 = vperm.xlu0 %118, %v52
  %v120 = vpop.permute.xlu0 %119
  %v123 = vunpack.c.l.s4 839922192
  %v124 = vunpack.c.0.s8 %v123
  %v125 = vlaneseq
  %v126 = vshrl.u32 %v125, 7
  %v127 = vsub.s32 %v124, %v126
  %v128 = vrot.slane %v120, %v127
  %130 = vset.pattern.permute.xlu0 0
  %131 = vperm.xlu0 %130, %v53
  %v132 = vpop.permute.xlu0 %131
  %v135 = vunpack.c.l.s4 839922192
  %v136 = vunpack.c.0.s8 %v135
  %v137 = vlaneseq
  %v138 = vshrl.u32 %v137, 7
  %v139 = vsub.s32 %v136, %v138
  %v140 = vrot.slane %v132, %v139
  %142 = vset.pattern.permute.xlu0 0
  %143 = vperm.xlu0 %142, %v54
  %v144 = vpop.permute.xlu0 %143
  %v147 = vunpack.c.l.s4 839922192
  %v148 = vunpack.c.0.s8 %v147
  %v149 = vlaneseq
  %v150 = vshrl.u32 %v149, 7
  %v151 = vsub.s32 %v148, %v150
  %v152 = vrot.slane %v144, %v151
  %154 = vset.pattern.permute.xlu0 0
  %155 = vperm.xlu0 %154, %v55
  %v156 = vpop.permute.xlu0 %155
  %v159 = vunpack.c.l.s4 839922192
  %v160 = vunpack.c.0.s8 %v159
  %v161 = vlaneseq
  %v162 = vshrl.u32 %v161, 7
  %v163 = vsub.s32 %v160, %v162
  %v164 = vrot.slane %v156, %v163
  %166 = vset.pattern.permute.xlu0 0
  %167 = vperm.xlu0 %166, %v56
  %v168 = vpop.permute.xlu0 %167
  %v171 = vunpack.c.l.s4 839922192
  %v172 = vunpack.c.0.s8 %v171
  %v173 = vlaneseq
  %v174 = vshrl.u32 %v173, 7
  %v175 = vsub.s32 %v172, %v174
  %v176 = vrot.slane %v168, %v175
  %178 = vset.pattern.permute.xlu0 0
  %179 = vperm.xlu0 %178, %v57
  %v180 = vpop.permute.xlu0 %179
  %v183 = vunpack.c.l.s4 839922192
  %v184 = vunpack.c.0.s8 %v183
  %v185 = vlaneseq
  %v186 = vshrl.u32 %v185, 7
  %v187 = vsub.s32 %v184, %v186
  %v188 = vrot.slane %v180, %v187
  %190 = vset.pattern.permute.xlu0 0
  %191 = vperm.xlu0 %190, %v58
  %v192 = vpop.permute.xlu0 %191
  %v195 = vunpack.c.l.s4 839922192
  %v196 = vunpack.c.0.s8 %v195
  %v197 = vlaneseq
  %v198 = vshrl.u32 %v197, 7
  %v199 = vsub.s32 %v196, %v198
  %v200 = vrot.slane %v192, %v199
  %202 = vset.pattern.permute.xlu0 0
  %203 = vperm.xlu0 %202, %v59
  %v204 = vpop.permute.xlu0 %203
  %v207 = vunpack.c.l.s4 839922192
  %v208 = vunpack.c.0.s8 %v207
  %v209 = vlaneseq
  %v210 = vshrl.u32 %v209, 7
  %v211 = vsub.s32 %v208, %v210
  %v212 = vrot.slane %v204, %v211
  %214 = vset.pattern.permute.xlu0 0
  %215 = vperm.xlu0 %214, %v60
  %v216 = vpop.permute.xlu0 %215
  %v219 = vunpack.c.l.s4 839922192
  %v220 = vunpack.c.0.s8 %v219
  %v221 = vlaneseq
  %v222 = vshrl.u32 %v221, 7
  %v223 = vsub.s32 %v220, %v222
  %v224 = vrot.slane %v216, %v223
  %226 = vset.pattern.permute.xlu0 0
  %227 = vperm.xlu0 %226, %v61
  %v228 = vpop.permute.xlu0 %227
  %v231 = vunpack.c.l.s4 839922192
  %v232 = vunpack.c.0.s8 %v231
  %v233 = vlaneseq
  %v234 = vshrl.u32 %v233, 7
  %v235 = vsub.s32 %v232, %v234
  %v236 = vrot.slane %v228, %v235
  %238 = vset.pattern.permute.xlu0 0
  %239 = vperm.xlu0 %238, %v62
  %v240 = vpop.permute.xlu0 %239
  %v243 = vunpack.c.l.s4 839922192
  %v244 = vunpack.c.0.s8 %v243
  %v245 = vlaneseq
  %v246 = vshrl.u32 %v245, 7
  %v247 = vsub.s32 %v244, %v246
  %v248 = vrot.slane %v240, %v247
  %250 = vset.pattern.permute.xlu0 0
  %251 = vperm.xlu0 %250, %v63
  %v252 = vpop.permute.xlu0 %251
  %v255 = vunpack.c.l.s4 839922192
  %v256 = vunpack.c.0.s8 %v255
  %v257 = vlaneseq
  %v258 = vshrl.u32 %v257, 7
  %v259 = vsub.s32 %v256, %v258
  %v260 = vrot.slane %v252, %v259
  %262 = vset.pattern.permute.xlu0 0
  %263 = vperm.xlu0 %262, %v64
  %v264 = vpop.permute.xlu0 %263
  %v267 = vunpack.c.l.s4 839922192
  %v268 = vunpack.c.0.s8 %v267
  %v269 = vlaneseq
  %v270 = vshrl.u32 %v269, 7
  %v271 = vsub.s32 %v268, %v270
  %v272 = vrot.slane %v264, %v271
  %274 = vset.pattern.permute.xlu0 0
  %275 = vperm.xlu0 %274, %v65
  %v276 = vpop.permute.xlu0 %275
  %v279 = vunpack.c.l.s4 839922192
  %v280 = vunpack.c.0.s8 %v279
  %v281 = vlaneseq
  %v282 = vshrl.u32 %v281, 7
  %v283 = vsub.s32 %v280, %v282
  %v284 = vrot.slane %v276, %v283
  %286 = vset.pattern.permute.xlu0 0
  %287 = vperm.xlu0 %286, %v66
  %v288 = vpop.permute.xlu0 %287
  %v291 = vunpack.c.l.s4 839922192
  %v292 = vunpack.c.0.s8 %v291
  %v293 = vlaneseq
  %v294 = vshrl.u32 %v293, 7
  %v295 = vsub.s32 %v292, %v294
  %v296 = vrot.slane %v288, %v295
  %298 = vset.pattern.permute.xlu0 0
  %299 = vperm.xlu0 %298, %v67
  %v300 = vpop.permute.xlu0 %299
  %v303 = vunpack.c.l.s4 839922192
  %v304 = vunpack.c.0.s8 %v303
  %v305 = vlaneseq
  %v306 = vshrl.u32 %v305, 7
  %v307 = vsub.s32 %v304, %v306
  %v308 = vrot.slane %v300, %v307
  %v309 = vmul.bf16 %v84, %v128
  %v310 = vmul.bf16 %v85, %v140
  %v311 = vmul.bf16 %v86, %v152
  %v312 = vmul.bf16 %v87, %v164
  %v313 = vmul.bf16 %v88, %v176
  %v314 = vmul.bf16 %v89, %v188
  %v315 = vmul.bf16 %v90, %v200
  %v316 = vmul.bf16 %v91, %v212
  %v317 = vmul.bf16 %v92, %v224
  %v318 = vmul.bf16 %v93, %v236
  %v319 = vmul.bf16 %v94, %v248
  %v320 = vmul.bf16 %v95, %v260
  %v321 = vmul.bf16 %v96, %v272
  %v322 = vmul.bf16 %v97, %v284
  %v323 = vmul.bf16 %v98, %v296
  %v324 = vmul.bf16 %v99, %v308
  %v341 = vunpack.c.l.b16 %v36
  %v342 = vunpack.c.l.b16 %v37
  %v343 = vunpack.c.l.b16 %v38
  %v344 = vunpack.c.l.b16 %v39
  %v345 = vunpack.c.l.b16 %v40
  %v346 = vunpack.c.l.b16 %v41
  %v347 = vunpack.c.l.b16 %v42
  %v348 = vunpack.c.l.b16 %v43
  %v349 = vunpack.c.l.b16 %v44
  %v350 = vunpack.c.l.b16 %v45
  %v351 = vunpack.c.l.b16 %v46
  %v352 = vunpack.c.l.b16 %v47
  %v353 = vunpack.c.l.b16 %v48
  %v354 = vunpack.c.l.b16 %v49
  %v355 = vunpack.c.l.b16 %v50
  %v356 = vunpack.c.l.b16 %v51
  %v357 = vpack.c.b16 %v342, %v341
  %v358 = vpack.c.b16 %v344, %v343
  %v359 = vpack.c.b16 %v346, %v345
  %v360 = vpack.c.b16 %v348, %v347
  %v361 = vpack.c.b16 %v350, %v349
  %v362 = vpack.c.b16 %v352, %v351
  %v363 = vpack.c.b16 %v354, %v353
  %v364 = vpack.c.b16 %v356, %v355
  %v389 = vunpack.c.l.b16 %v309
  %v390 = vunpack.c.l.b16 %v310
  %v391 = vunpack.c.l.b16 %v311
  %v392 = vunpack.c.l.b16 %v312
  %v393 = vunpack.c.l.b16 %v313
  %v394 = vunpack.c.l.b16 %v314
  %v395 = vunpack.c.l.b16 %v315
  %v396 = vunpack.c.l.b16 %v316
  %v397 = vunpack.c.l.b16 %v317
  %v398 = vunpack.c.l.b16 %v318
  %v399 = vunpack.c.l.b16 %v319
  %v400 = vunpack.c.l.b16 %v320
  %v401 = vunpack.c.l.b16 %v321
  %v402 = vunpack.c.l.b16 %v322
  %v403 = vunpack.c.l.b16 %v323
  %v404 = vunpack.c.l.b16 %v324
  %v405 = vpack.c.b16 %v390, %v389
  %v406 = vpack.c.b16 %v392, %v391
  %v407 = vpack.c.b16 %v394, %v393
  %v408 = vpack.c.b16 %v396, %v395
  %v409 = vpack.c.b16 %v398, %v397
  %v410 = vpack.c.b16 %v400, %v399
  %v411 = vpack.c.b16 %v402, %v401
  %v412 = vpack.c.b16 %v404, %v403
  %421 = vmatprep.subr.bf16.mxu0 0
  %422 = vmatpush1.bf16.msra.mxu0 %v412
  %423 = vmatprep.subr.bf16.mxu0 0
  %424 = vmatpush1.bf16.msra.mxu0 %v411
  %425 = vmatprep.subr.bf16.mxu0 0
  %426 = vmatpush1.bf16.msra.mxu0 %v410
  %427 = vmatprep.subr.bf16.mxu0 0
  %428 = vmatpush1.bf16.msra.mxu0 %v409
  %429 = vmatprep.subr.bf16.mxu0 0
  %430 = vmatpush1.bf16.msra.mxu0 %v408
  %431 = vmatprep.subr.bf16.mxu0 0
  %432 = vmatpush1.bf16.msra.mxu0 %v407
  %433 = vmatprep.subr.bf16.mxu0 0
  %434 = vmatpush1.bf16.msra.mxu0 %v406
  %435 = vmatprep.subr.bf16.mxu0 0
  %436 = vmatpush1.bf16.msra.mxu0 %v405
  %437 = vmatprep.subr.bf16.mxu0 0
  %438 = vmatpush2.bf16.msra.mxu0 0
  %439 = vmatprep.subr.bf16.mxu0 0
  %440 = vmatpush2.bf16.msra.mxu0 0
  %441 = vmatprep.subr.bf16.mxu0 0
  %442 = vmatpush2.bf16.msra.mxu0 0
  %443 = vmatprep.subr.bf16.mxu0 0
  %444 = vmatpush2.bf16.msra.mxu0 0
  %445 = vmatprep.subr.bf16.mxu0 0
  %446 = vmatpush2.bf16.msra.mxu0 0
  %447 = vmatprep.subr.bf16.mxu0 0
  %448 = vmatpush2.bf16.msra.mxu0 0
  %449 = vmatprep.subr.bf16.mxu0 0
  %450 = vmatpush2.bf16.msra.mxu0 0
  %451 = vmatprep.subr.bf16.mxu0 0
  %452 = vmatpush2.bf16.msra.mxu0 0
  %453 = vmatprep.mubr.bf16.mxu0 0
  %454 = vmatmul.mubr.bf16.gmra.mxu0 %v357
  %v455 = vpop.f32.mrf.mxu0
  %v456 = vadd.f32 0.0, %v455
  %v457 = vpop.f32.mrf.mxu0
  %v458 = vpop.f32.mrf.mxu0
  %v459 = vadd.f32 0.0, %v458
  %v460 = vpop.f32.mrf.mxu0
  %461 = vmatprep.mubr.bf16.mxu0 0
  %462 = vmatmul.mubr.bf16.gmra.mxu0 %v358
  %v463 = vpop.f32.mrf.mxu0
  %v464 = vadd.f32 0.0, %v463
  %v465 = vpop.f32.mrf.mxu0
  %v466 = vpop.f32.mrf.mxu0
  %v467 = vadd.f32 0.0, %v466
  %v468 = vpop.f32.mrf.mxu0
  %469 = vmatprep.mubr.bf16.mxu0 0
  %470 = vmatmul.mubr.bf16.gmra.mxu0 %v359
  %v471 = vpop.f32.mrf.mxu0
  %v472 = vadd.f32 0.0, %v471
  %v473 = vpop.f32.mrf.mxu0
  %v474 = vpop.f32.mrf.mxu0
  %v475 = vadd.f32 0.0, %v474
  %v476 = vpop.f32.mrf.mxu0
  %477 = vmatprep.mubr.bf16.mxu0 0
  %478 = vmatmul.mubr.bf16.gmra.mxu0 %v360
  %v479 = vpop.f32.mrf.mxu0
  %v480 = vadd.f32 0.0, %v479
  %v481 = vpop.f32.mrf.mxu0
  %v482 = vpop.f32.mrf.mxu0
  %v483 = vadd.f32 0.0, %v482
  %v484 = vpop.f32.mrf.mxu0
  %485 = vmatprep.mubr.bf16.mxu0 0
  %486 = vmatmul.mubr.bf16.gmra.mxu0 %v361
  %v487 = vpop.f32.mrf.mxu0
  %v488 = vadd.f32 0.0, %v487
  %v489 = vpop.f32.mrf.mxu0
  %v490 = vpop.f32.mrf.mxu0
  %v491 = vadd.f32 0.0, %v490
  %v492 = vpop.f32.mrf.mxu0
  %493 = vmatprep.mubr.bf16.mxu0 0
  %494 = vmatmul.mubr.bf16.gmra.mxu0 %v362
  %v495 = vpop.f32.mrf.mxu0
  %v496 = vadd.f32 0.0, %v495
  %v497 = vpop.f32.mrf.mxu0
  %v498 = vpop.f32.mrf.mxu0
  %v499 = vadd.f32 0.0, %v498
  %v500 = vpop.f32.mrf.mxu0
  %501 = vmatprep.mubr.bf16.mxu0 0
  %502 = vmatmul.mubr.bf16.gmra.mxu0 %v363
  %v503 = vpop.f32.mrf.mxu0
  %v504 = vadd.f32 0.0, %v503
  %v505 = vpop.f32.mrf.mxu0
  %v506 = vpop.f32.mrf.mxu0
  %v507 = vadd.f32 0.0, %v506
  %v508 = vpop.f32.mrf.mxu0
  %509 = vmatprep.mubr.bf16.mxu0 0
  %510 = vmatmul.mubr.bf16.gmra.mxu0 %v364
  %v511 = vpop.f32.mrf.mxu0
  %v512 = vadd.f32 0.0, %v511
  %v513 = vpop.f32.mrf.mxu0
  %v514 = vpop.f32.mrf.mxu0
  %v515 = vadd.f32 0.0, %v514
  %v516 = vpop.f32.mrf.mxu0
  %517 = vdwg.mxu0
  %519 = vset.pattern.permute.xlu0 0
  %520 = vperm.xlu0 %519, %v68
  %v521 = vpop.permute.xlu0 %520
  %524 = vset.pattern.permute.xlu0 0
  %525 = vperm.xlu0 %524, %v69
  %v526 = vpop.permute.xlu0 %525
  %529 = vset.pattern.permute.xlu0 0
  %530 = vperm.xlu0 %529, %v70
  %v531 = vpop.permute.xlu0 %530
  %534 = vset.pattern.permute.xlu0 0
  %535 = vperm.xlu0 %534, %v71
  %v536 = vpop.permute.xlu0 %535
  %539 = vset.pattern.permute.xlu0 0
  %540 = vperm.xlu0 %539, %v72
  %v541 = vpop.permute.xlu0 %540
  %544 = vset.pattern.permute.xlu0 0
  %545 = vperm.xlu0 %544, %v73
  %v546 = vpop.permute.xlu0 %545
  %549 = vset.pattern.permute.xlu0 0
  %550 = vperm.xlu0 %549, %v74
  %v551 = vpop.permute.xlu0 %550
  %554 = vset.pattern.permute.xlu0 0
  %555 = vperm.xlu0 %554, %v75
  %v556 = vpop.permute.xlu0 %555
  %559 = vset.pattern.permute.xlu0 0
  %560 = vperm.xlu0 %559, %v76
  %v561 = vpop.permute.xlu0 %560
  %564 = vset.pattern.permute.xlu0 0
  %565 = vperm.xlu0 %564, %v77
  %v566 = vpop.permute.xlu0 %565
  %569 = vset.pattern.permute.xlu0 0
  %570 = vperm.xlu0 %569, %v78
  %v571 = vpop.permute.xlu0 %570
  %574 = vset.pattern.permute.xlu0 0
  %575 = vperm.xlu0 %574, %v79
  %v576 = vpop.permute.xlu0 %575
  %579 = vset.pattern.permute.xlu0 0
  %580 = vperm.xlu0 %579, %v80
  %v581 = vpop.permute.xlu0 %580
  %584 = vset.pattern.permute.xlu0 0
  %585 = vperm.xlu0 %584, %v81
  %v586 = vpop.permute.xlu0 %585
  %589 = vset.pattern.permute.xlu0 0
  %590 = vperm.xlu0 %589, %v82
  %v591 = vpop.permute.xlu0 %590
  %594 = vset.pattern.permute.xlu0 0
  %595 = vperm.xlu0 %594, %v83
  %v596 = vpop.permute.xlu0 %595
  %v598 = vmul.f32 %v456, %v521
  %v599 = vmul.f32 %v459, %v526
  %v600 = vmul.f32 %v464, %v531
  %v601 = vmul.f32 %v467, %v536
  %v602 = vmul.f32 %v472, %v541
  %v603 = vmul.f32 %v475, %v546
  %v604 = vmul.f32 %v480, %v551
  %v605 = vmul.f32 %v483, %v556
  %v606 = vmul.f32 %v488, %v561
  %v607 = vmul.f32 %v491, %v566
  %v608 = vmul.f32 %v496, %v571
  %v609 = vmul.f32 %v499, %v576
  %v610 = vmul.f32 %v504, %v581
  %v611 = vmul.f32 %v507, %v586
  %v612 = vmul.f32 %v512, %v591
  %v613 = vmul.f32 %v515, %v596
  %v615 = vlaneseq
  %v616 = vshrl.u32 %v615, 7
  %v617 = vsub.s32 0, %v616
  %v618 = vrot.slane %v116, %v617
  %620 = vmatprep.subr.mxu0 0.0
  %621 = vmatpush1.msra.mxu0 %v115
  %622 = vmatprep.subr.mxu0 0.0
  %623 = vmatpush1.msra.mxu0 %v114
  %624 = vmatprep.subr.mxu0 0.0
  %625 = vmatpush1.msra.mxu0 %v113
  %626 = vmatprep.subr.mxu0 0.0
  %627 = vmatpush1.msra.mxu0 %v112
  %628 = vmatprep.subr.mxu0 0.0
  %629 = vmatpush1.msra.mxu0 %v111
  %630 = vmatprep.subr.mxu0 0.0
  %631 = vmatpush1.msra.mxu0 %v110
  %632 = vmatprep.subr.mxu0 0.0
  %633 = vmatpush1.msra.mxu0 %v109
  %634 = vmatprep.subr.mxu0 0.0
  %635 = vmatpush1.msra.mxu0 %v108
  %636 = vmatprep.subr.mxu0 0.0
  %637 = vmatpush1.msra.mxu0 %v107
  %638 = vmatprep.subr.mxu0 0.0
  %639 = vmatpush1.msra.mxu0 %v106
  %640 = vmatprep.subr.mxu0 0.0
  %641 = vmatpush1.msra.mxu0 %v105
  %642 = vmatprep.subr.mxu0 0.0
  %643 = vmatpush1.msra.mxu0 %v104
  %644 = vmatprep.subr.mxu0 0.0
  %645 = vmatpush1.msra.mxu0 %v103
  %646 = vmatprep.subr.mxu0 0.0
  %647 = vmatpush1.msra.mxu0 %v102
  %648 = vmatprep.subr.mxu0 0.0
  %649 = vmatpush1.msra.mxu0 %v101
  %650 = vmatprep.subr.mxu0 0.0
  %651 = vmatpush1.msra.mxu0 %v100
  %652 = vmatprep.subr.mxu0 0.0
  %653 = vmatpush2.msra.mxu0 0.0
  %654 = vmatprep.subr.mxu0 0.0
  %655 = vmatpush2.msra.mxu0 0.0
  %656 = vmatprep.subr.mxu0 0.0
  %657 = vmatpush2.msra.mxu0 0.0
  %658 = vmatprep.subr.mxu0 0.0
  %659 = vmatpush2.msra.mxu0 0.0
  %660 = vmatprep.subr.mxu0 0.0
  %661 = vmatpush2.msra.mxu0 0.0
  %662 = vmatprep.subr.mxu0 0.0
  %663 = vmatpush2.msra.mxu0 0.0
  %664 = vmatprep.subr.mxu0 0.0
  %665 = vmatpush2.msra.mxu0 0.0
  %666 = vmatprep.subr.mxu0 0.0
  %667 = vmatpush2.msra.mxu0 0.0
  %668 = vmatprep.subr.mxu0 0.0
  %669 = vmatpush2.msra.mxu0 0.0
  %670 = vmatprep.subr.mxu0 0.0
  %671 = vmatpush2.msra.mxu0 0.0
  %672 = vmatprep.subr.mxu0 0.0
  %673 = vmatpush2.msra.mxu0 0.0
  %674 = vmatprep.subr.mxu0 0.0
  %675 = vmatpush2.msra.mxu0 0.0
  %676 = vmatprep.subr.mxu0 0.0
  %677 = vmatpush2.msra.mxu0 0.0
  %678 = vmatprep.subr.mxu0 0.0
  %679 = vmatpush2.msra.mxu0 0.0
  %680 = vmatprep.subr.mxu0 0.0
  %681 = vmatpush2.msra.mxu0 0.0
  %682 = vmatprep.subr.mxu0 0.0
  %683 = vmatpush2.msra.mxu0 0.0
  %684 = vmatprep.mubr.f32.mxu0 0.0
  %685 = vmatmul.mubr.f32.gmra.mxu0 %v598
  %v686 = vpop.f32.mrf.mxu0
  %v687 = vadd.f32 %v618, %v686
  %v688 = vpop.f32.mrf.mxu0
  %689 = vmatprep.mubr.f32.mxu0 0.0
  %690 = vmatmul.mubr.f32.gmra.mxu0 %v599
  %v691 = vpop.f32.mrf.mxu0
  %v692 = vadd.f32 %v618, %v691
  %v693 = vpop.f32.mrf.mxu0
  %694 = vmatprep.mubr.f32.mxu0 0.0
  %695 = vmatmul.mubr.f32.gmra.mxu0 %v600
  %v696 = vpop.f32.mrf.mxu0
  %v697 = vadd.f32 %v618, %v696
  %v698 = vpop.f32.mrf.mxu0
  %699 = vmatprep.mubr.f32.mxu0 0.0
  %700 = vmatmul.mubr.f32.gmra.mxu0 %v601
  %v701 = vpop.f32.mrf.mxu0
  %v702 = vadd.f32 %v618, %v701
  %v703 = vpop.f32.mrf.mxu0
  %704 = vmatprep.mubr.f32.mxu0 0.0
  %705 = vmatmul.mubr.f32.gmra.mxu0 %v602
  %v706 = vpop.f32.mrf.mxu0
  %v707 = vadd.f32 %v618, %v706
  %v708 = vpop.f32.mrf.mxu0
  %709 = vmatprep.mubr.f32.mxu0 0.0
  %710 = vmatmul.mubr.f32.gmra.mxu0 %v603
  %v711 = vpop.f32.mrf.mxu0
  %v712 = vadd.f32 %v618, %v711
  %v713 = vpop.f32.mrf.mxu0
  %714 = vmatprep.mubr.f32.mxu0 0.0
  %715 = vmatmul.mubr.f32.gmra.mxu0 %v604
  %v716 = vpop.f32.mrf.mxu0
  %v717 = vadd.f32 %v618, %v716
  %v718 = vpop.f32.mrf.mxu0
  %719 = vmatprep.mubr.f32.mxu0 0.0
  %720 = vmatmul.mubr.f32.gmra.mxu0 %v605
  %v721 = vpop.f32.mrf.mxu0
  %v722 = vadd.f32 %v618, %v721
  %v723 = vpop.f32.mrf.mxu0
  %724 = vmatprep.mubr.f32.mxu0 0.0
  %725 = vmatmul.mubr.f32.gmra.mxu0 %v606
  %v726 = vpop.f32.mrf.mxu0
  %v727 = vadd.f32 %v618, %v726
  %v728 = vpop.f32.mrf.mxu0
  %729 = vmatprep.mubr.f32.mxu0 0.0
  %730 = vmatmul.mubr.f32.gmra.mxu0 %v607
  %v731 = vpop.f32.mrf.mxu0
  %v732 = vadd.f32 %v618, %v731
  %v733 = vpop.f32.mrf.mxu0
  %734 = vmatprep.mubr.f32.mxu0 0.0
  %735 = vmatmul.mubr.f32.gmra.mxu0 %v608
  %v736 = vpop.f32.mrf.mxu0
  %v737 = vadd.f32 %v618, %v736
  %v738 = vpop.f32.mrf.mxu0
  %739 = vmatprep.mubr.f32.mxu0 0.0
  %740 = vmatmul.mubr.f32.gmra.mxu0 %v609
  %v741 = vpop.f32.mrf.mxu0
  %v742 = vadd.f32 %v618, %v741
  %v743 = vpop.f32.mrf.mxu0
  %744 = vmatprep.mubr.f32.mxu0 0.0
  %745 = vmatmul.mubr.f32.gmra.mxu0 %v610
  %v746 = vpop.f32.mrf.mxu0
  %v747 = vadd.f32 %v618, %v746
  %v748 = vpop.f32.mrf.mxu0
  %749 = vmatprep.mubr.f32.mxu0 0.0
  %750 = vmatmul.mubr.f32.gmra.mxu0 %v611
  %v751 = vpop.f32.mrf.mxu0
  %v752 = vadd.f32 %v618, %v751
  %v753 = vpop.f32.mrf.mxu0
  %754 = vmatprep.mubr.f32.mxu0 0.0
  %755 = vmatmul.mubr.f32.gmra.mxu0 %v612
  %v756 = vpop.f32.mrf.mxu0
  %v757 = vadd.f32 %v618, %v756
  %v758 = vpop.f32.mrf.mxu0
  %759 = vmatprep.mubr.f32.mxu0 0.0
  %760 = vmatmul.mubr.f32.gmra.mxu0 %v613
  %v761 = vpop.f32.mrf.mxu0
  %v762 = vadd.f32 %v618, %v761
  %v763 = vpop.f32.mrf.mxu0
  %764 = vdwg.mxu0
  %v765 = vmax.f32 %v687, 0.0
  %v766 = vmax.f32 %v692, 0.0
  %v767 = vmax.f32 %v697, 0.0
  %v768 = vmax.f32 %v702, 0.0
  %v769 = vmax.f32 %v707, 0.0
  %v770 = vmax.f32 %v712, 0.0
  %v771 = vmax.f32 %v717, 0.0
  %v772 = vmax.f32 %v722, 0.0
  %v773 = vmax.f32 %v727, 0.0
  %v774 = vmax.f32 %v732, 0.0
  %v775 = vmax.f32 %v737, 0.0
  %v776 = vmax.f32 %v742, 0.0
  %v777 = vmax.f32 %v747, 0.0
  %v778 = vmax.f32 %v752, 0.0
  %v779 = vmax.f32 %v757, 0.0
  %v780 = vmax.f32 %v762, 0.0
  %v781 = vpack.c.bf16 %v766, %v765
  %v782 = vpack.c.bf16 %v768, %v767
  %v783 = vpack.c.bf16 %v770, %v769
  %v784 = vpack.c.bf16 %v772, %v771
  %v785 = vpack.c.bf16 %v774, %v773
  %v786 = vpack.c.bf16 %v776, %v775
  %v787 = vpack.c.bf16 %v778, %v777
  %v788 = vpack.c.bf16 %v780, %v779
  %v789 = vld [vmem:[%s6] sm:$0xff]
  %v790 = vld [vmem:[%s6 + $0x8] sm:$0xff]
  %v791 = vld [vmem:[%s6 + $0x10] sm:$0xff]
  %v792 = vld [vmem:[%s6 + $0x18] sm:$0xff]
  %v793 = vld [vmem:[%s6 + $0x20] sm:$0xff]
  %v794 = vld [vmem:[%s6 + $0x28] sm:$0xff]
  %v795 = vld [vmem:[%s6 + $0x30] sm:$0xff]
  %v796 = vld [vmem:[%s6 + $0x38] sm:$0xff]
  %v797 = vld [vmem:[%s6 + $0x40] sm:$0xff]
  %v798 = vld [vmem:[%s6 + $0x48] sm:$0xff]
  %v799 = vld [vmem:[%s6 + $0x50] sm:$0xff]
  %v800 = vld [vmem:[%s6 + $0x58] sm:$0xff]
  %v801 = vld [vmem:[%s6 + $0x60] sm:$0xff]
  %v802 = vld [vmem:[%s6 + $0x68] sm:$0xff]
  %v803 = vld [vmem:[%s6 + $0x70] sm:$0xff]
  %v804 = vld [vmem:[%s6 + $0x78] sm:$0xff]
  %v805 = vld [vmem:[%s7] sm:$0x1]
  %v822 = vunpack.c.l.b16 %v128
  %v823 = vunpack.c.l.b16 %v140
  %v824 = vunpack.c.l.b16 %v152
  %v825 = vunpack.c.l.b16 %v164
  %v826 = vunpack.c.l.b16 %v176
  %v827 = vunpack.c.l.b16 %v188
  %v828 = vunpack.c.l.b16 %v200
  %v829 = vunpack.c.l.b16 %v212
  %v830 = vunpack.c.l.b16 %v224
  %v831 = vunpack.c.l.b16 %v236
  %v832 = vunpack.c.l.b16 %v248
  %v833 = vunpack.c.l.b16 %v260
  %v834 = vunpack.c.l.b16 %v272
  %v835 = vunpack.c.l.b16 %v284
  %v836 = vunpack.c.l.b16 %v296
  %v837 = vunpack.c.l.b16 %v308
  %v838 = vpack.c.b16 %v823, %v822
  %v839 = vpack.c.b16 %v825, %v824
  %v840 = vpack.c.b16 %v827, %v826
  %v841 = vpack.c.b16 %v829, %v828
  %v842 = vpack.c.b16 %v831, %v830
  %v843 = vpack.c.b16 %v833, %v832
  %v844 = vpack.c.b16 %v835, %v834
  %v845 = vpack.c.b16 %v837, %v836
  %v854 = vmul.bf16 %v781, %v838
  %v855 = vmul.bf16 %v782, %v839
  %v856 = vmul.bf16 %v783, %v840
  %v857 = vmul.bf16 %v784, %v841
  %v858 = vmul.bf16 %v785, %v842
  %v859 = vmul.bf16 %v786, %v843
  %v860 = vmul.bf16 %v787, %v844
  %v861 = vmul.bf16 %v788, %v845
  %862 = vmatprep.subr.bf16.mxu0 0
  %863 = vmatpush1.bf16.msra.mxu0 %v861
  %864 = vmatprep.subr.bf16.mxu0 0
  %865 = vmatpush1.bf16.msra.mxu0 %v860
  %866 = vmatprep.subr.bf16.mxu0 0
  %867 = vmatpush1.bf16.msra.mxu0 %v859
  %868 = vmatprep.subr.bf16.mxu0 0
  %869 = vmatpush1.bf16.msra.mxu0 %v858
  %870 = vmatprep.subr.bf16.mxu0 0
  %871 = vmatpush1.bf16.msra.mxu0 %v857
  %872 = vmatprep.subr.bf16.mxu0 0
  %873 = vmatpush1.bf16.msra.mxu0 %v856
  %874 = vmatprep.subr.bf16.mxu0 0
  %875 = vmatpush1.bf16.msra.mxu0 %v855
  %876 = vmatprep.subr.bf16.mxu0 0
  %877 = vmatpush1.bf16.msra.mxu0 %v854
  %878 = vmatprep.subr.bf16.mxu0 0
  %879 = vmatpush2.bf16.msra.mxu0 0
  %880 = vmatprep.subr.bf16.mxu0 0
  %881 = vmatpush2.bf16.msra.mxu0 0
  %882 = vmatprep.subr.bf16.mxu0 0
  %883 = vmatpush2.bf16.msra.mxu0 0
  %884 = vmatprep.subr.bf16.mxu0 0
  %885 = vmatpush2.bf16.msra.mxu0 0
  %886 = vmatprep.subr.bf16.mxu0 0
  %887 = vmatpush2.bf16.msra.mxu0 0
  %888 = vmatprep.subr.bf16.mxu0 0
  %889 = vmatpush2.bf16.msra.mxu0 0
  %890 = vmatprep.subr.bf16.mxu0 0
  %891 = vmatpush2.bf16.msra.mxu0 0
  %892 = vmatprep.subr.bf16.mxu0 0
  %893 = vmatpush2.bf16.msra.mxu0 0
  %894 = vmatprep.mubr.bf16.mxu0 0
  %895 = vmatmul.mubr.bf16.gmra.mxu0 %v357
  %v896 = vpop.f32.mrf.mxu0
  %v897 = vadd.f32 0.0, %v896
  %v898 = vpop.f32.mrf.mxu0
  %v899 = vpop.f32.mrf.mxu0
  %v900 = vadd.f32 0.0, %v899
  %v901 = vpop.f32.mrf.mxu0
  %902 = vmatprep.mubr.bf16.mxu0 0
  %903 = vmatmul.mubr.bf16.gmra.mxu0 %v358
  %v904 = vpop.f32.mrf.mxu0
  %v905 = vadd.f32 0.0, %v904
  %v906 = vpop.f32.mrf.mxu0
  %v907 = vpop.f32.mrf.mxu0
  %v908 = vadd.f32 0.0, %v907
  %v909 = vpop.f32.mrf.mxu0
  %910 = vmatprep.mubr.bf16.mxu0 0
  %911 = vmatmul.mubr.bf16.gmra.mxu0 %v359
  %v912 = vpop.f32.mrf.mxu0
  %v913 = vadd.f32 0.0, %v912
  %v914 = vpop.f32.mrf.mxu0
  %v915 = vpop.f32.mrf.mxu0
  %v916 = vadd.f32 0.0, %v915
  %v917 = vpop.f32.mrf.mxu0
  %918 = vmatprep.mubr.bf16.mxu0 0
  %919 = vmatmul.mubr.bf16.gmra.mxu0 %v360
  %v920 = vpop.f32.mrf.mxu0
  %v921 = vadd.f32 0.0, %v920
  %v922 = vpop.f32.mrf.mxu0
  %v923 = vpop.f32.mrf.mxu0
  %v924 = vadd.f32 0.0, %v923
  %v925 = vpop.f32.mrf.mxu0
  %926 = vmatprep.mubr.bf16.mxu0 0
  %927 = vmatmul.mubr.bf16.gmra.mxu0 %v361
  %v928 = vpop.f32.mrf.mxu0
  %v929 = vadd.f32 0.0, %v928
  %v930 = vpop.f32.mrf.mxu0
  %v931 = vpop.f32.mrf.mxu0
  %v932 = vadd.f32 0.0, %v931
  %v933 = vpop.f32.mrf.mxu0
  %934 = vmatprep.mubr.bf16.mxu0 0
  %935 = vmatmul.mubr.bf16.gmra.mxu0 %v362
  %v936 = vpop.f32.mrf.mxu0
  %v937 = vadd.f32 0.0, %v936
  %v938 = vpop.f32.mrf.mxu0
  %v939 = vpop.f32.mrf.mxu0
  %v940 = vadd.f32 0.0, %v939
  %v941 = vpop.f32.mrf.mxu0
  %942 = vmatprep.mubr.bf16.mxu0 0
  %943 = vmatmul.mubr.bf16.gmra.mxu0 %v363
  %v944 = vpop.f32.mrf.mxu0
  %v945 = vadd.f32 0.0, %v944
  %v946 = vpop.f32.mrf.mxu0
  %v947 = vpop.f32.mrf.mxu0
  %v948 = vadd.f32 0.0, %v947
  %v949 = vpop.f32.mrf.mxu0
  %950 = vmatprep.mubr.bf16.mxu0 0
  %951 = vmatmul.mubr.bf16.gmra.mxu0 %v364
  %v952 = vpop.f32.mrf.mxu0
  %v953 = vadd.f32 0.0, %v952
  %v954 = vpop.f32.mrf.mxu0
  %v955 = vpop.f32.mrf.mxu0
  %v956 = vadd.f32 0.0, %v955
  %v957 = vpop.f32.mrf.mxu0
  %958 = vdwg.mxu0
  %v959 = vmul.f32 %v897, %v521
  %v960 = vmul.f32 %v900, %v526
  %v961 = vmul.f32 %v905, %v531
  %v962 = vmul.f32 %v908, %v536
  %v963 = vmul.f32 %v913, %v541
  %v964 = vmul.f32 %v916, %v546
  %v965 = vmul.f32 %v921, %v551
  %v966 = vmul.f32 %v924, %v556
  %v967 = vmul.f32 %v929, %v561
  %v968 = vmul.f32 %v932, %v566
  %v969 = vmul.f32 %v937, %v571
  %v970 = vmul.f32 %v940, %v576
  %v971 = vmul.f32 %v945, %v581
  %v972 = vmul.f32 %v948, %v586
  %v973 = vmul.f32 %v953, %v591
  %v974 = vmul.f32 %v956, %v596
  %v976 = vlaneseq
  %v977 = vshrl.u32 %v976, 7
  %v978 = vsub.s32 0, %v977
  %v979 = vrot.slane %v805, %v978
  %981 = vmatprep.subr.mxu0 0.0
  %982 = vmatpush1.msra.mxu0 %v804
  %983 = vmatprep.subr.mxu0 0.0
  %984 = vmatpush1.msra.mxu0 %v803
  %985 = vmatprep.subr.mxu0 0.0
  %986 = vmatpush1.msra.mxu0 %v802
  %987 = vmatprep.subr.mxu0 0.0
  %988 = vmatpush1.msra.mxu0 %v801
  %989 = vmatprep.subr.mxu0 0.0
  %990 = vmatpush1.msra.mxu0 %v800
  %991 = vmatprep.subr.mxu0 0.0
  %992 = vmatpush1.msra.mxu0 %v799
  %993 = vmatprep.subr.mxu0 0.0
  %994 = vmatpush1.msra.mxu0 %v798
  %995 = vmatprep.subr.mxu0 0.0
  %996 = vmatpush1.msra.mxu0 %v797
  %997 = vmatprep.subr.mxu0 0.0
  %998 = vmatpush1.msra.mxu0 %v796
  %999 = vmatprep.subr.mxu0 0.0
  %1000 = vmatpush1.msra.mxu0 %v795
  %1001 = vmatprep.subr.mxu0 0.0
  %1002 = vmatpush1.msra.mxu0 %v794
  %1003 = vmatprep.subr.mxu0 0.0
  %1004 = vmatpush1.msra.mxu0 %v793
  %1005 = vmatprep.subr.mxu0 0.0
  %1006 = vmatpush1.msra.mxu0 %v792
  %1007 = vmatprep.subr.mxu0 0.0
  %1008 = vmatpush1.msra.mxu0 %v791
  %1009 = vmatprep.subr.mxu0 0.0
  %1010 = vmatpush1.msra.mxu0 %v790
  %1011 = vmatprep.subr.mxu0 0.0
  %1012 = vmatpush1.msra.mxu0 %v789
  %1013 = vmatprep.subr.mxu0 0.0
  %1014 = vmatpush2.msra.mxu0 0.0
  %1015 = vmatprep.subr.mxu0 0.0
  %1016 = vmatpush2.msra.mxu0 0.0
  %1017 = vmatprep.subr.mxu0 0.0
  %1018 = vmatpush2.msra.mxu0 0.0
  %1019 = vmatprep.subr.mxu0 0.0
  %1020 = vmatpush2.msra.mxu0 0.0
  %1021 = vmatprep.subr.mxu0 0.0
  %1022 = vmatpush2.msra.mxu0 0.0
  %1023 = vmatprep.subr.mxu0 0.0
  %1024 = vmatpush2.msra.mxu0 0.0
  %1025 = vmatprep.subr.mxu0 0.0
  %1026 = vmatpush2.msra.mxu0 0.0
  %1027 = vmatprep.subr.mxu0 0.0
  %1028 = vmatpush2.msra.mxu0 0.0
  %1029 = vmatprep.subr.mxu0 0.0
  %1030 = vmatpush2.msra.mxu0 0.0
  %1031 = vmatprep.subr.mxu0 0.0
  %1032 = vmatpush2.msra.mxu0 0.0
  %1033 = vmatprep.subr.mxu0 0.0
  %1034 = vmatpush2.msra.mxu0 0.0
  %1035 = vmatprep.subr.mxu0 0.0
  %1036 = vmatpush2.msra.mxu0 0.0
  %1037 = vmatprep.subr.mxu0 0.0
  %1038 = vmatpush2.msra.mxu0 0.0
  %1039 = vmatprep.subr.mxu0 0.0
  %1040 = vmatpush2.msra.mxu0 0.0
  %1041 = vmatprep.subr.mxu0 0.0
  %1042 = vmatpush2.msra.mxu0 0.0
  %1043 = vmatprep.subr.mxu0 0.0
  %1044 = vmatpush2.msra.mxu0 0.0
  %1045 = vmatprep.mubr.f32.mxu0 0.0
  %1046 = vmatmul.mubr.f32.gmra.mxu0 %v959
  %v1047 = vpop.f32.mrf.mxu0
  %v1048 = vadd.f32 %v979, %v1047
  %v1049 = vpop.f32.mrf.mxu0
  %1050 = vmatprep.mubr.f32.mxu0 0.0
  %1051 = vmatmul.mubr.f32.gmra.mxu0 %v960
  %v1052 = vpop.f32.mrf.mxu0
  %v1053 = vadd.f32 %v979, %v1052
  %v1054 = vpop.f32.mrf.mxu0
  %1055 = vmatprep.mubr.f32.mxu0 0.0
  %1056 = vmatmul.mubr.f32.gmra.mxu0 %v961
  %v1057 = vpop.f32.mrf.mxu0
  %v1058 = vadd.f32 %v979, %v1057
  %v1059 = vpop.f32.mrf.mxu0
  %1060 = vmatprep.mubr.f32.mxu0 0.0
  %1061 = vmatmul.mubr.f32.gmra.mxu0 %v962
  %v1062 = vpop.f32.mrf.mxu0
  %v1063 = vadd.f32 %v979, %v1062
  %v1064 = vpop.f32.mrf.mxu0
  %1065 = vmatprep.mubr.f32.mxu0 0.0
  %1066 = vmatmul.mubr.f32.gmra.mxu0 %v963
  %v1067 = vpop.f32.mrf.mxu0
  %v1068 = vadd.f32 %v979, %v1067
  %v1069 = vpop.f32.mrf.mxu0
  %1070 = vmatprep.mubr.f32.mxu0 0.0
  %1071 = vmatmul.mubr.f32.gmra.mxu0 %v964
  %v1072 = vpop.f32.mrf.mxu0
  %v1073 = vadd.f32 %v979, %v1072
  %v1074 = vpop.f32.mrf.mxu0
  %1075 = vmatprep.mubr.f32.mxu0 0.0
  %1076 = vmatmul.mubr.f32.gmra.mxu0 %v965
  %v1077 = vpop.f32.mrf.mxu0
  %v1078 = vadd.f32 %v979, %v1077
  %v1079 = vpop.f32.mrf.mxu0
  %1080 = vmatprep.mubr.f32.mxu0 0.0
  %1081 = vmatmul.mubr.f32.gmra.mxu0 %v966
  %v1082 = vpop.f32.mrf.mxu0
  %v1083 = vadd.f32 %v979, %v1082
  %v1084 = vpop.f32.mrf.mxu0
  %1085 = vmatprep.mubr.f32.mxu0 0.0
  %1086 = vmatmul.mubr.f32.gmra.mxu0 %v967
  %v1087 = vpop.f32.mrf.mxu0
  %v1088 = vadd.f32 %v979, %v1087
  %v1089 = vpop.f32.mrf.mxu0
  %1090 = vmatprep.mubr.f32.mxu0 0.0
  %1091 = vmatmul.mubr.f32.gmra.mxu0 %v968
  %v1092 = vpop.f32.mrf.mxu0
  %v1093 = vadd.f32 %v979, %v1092
  %v1094 = vpop.f32.mrf.mxu0
  %1095 = vmatprep.mubr.f32.mxu0 0.0
  %1096 = vmatmul.mubr.f32.gmra.mxu0 %v969
  %v1097 = vpop.f32.mrf.mxu0
  %v1098 = vadd.f32 %v979, %v1097
  %v1099 = vpop.f32.mrf.mxu0
  %1100 = vmatprep.mubr.f32.mxu0 0.0
  %1101 = vmatmul.mubr.f32.gmra.mxu0 %v970
  %v1102 = vpop.f32.mrf.mxu0
  %v1103 = vadd.f32 %v979, %v1102
  %v1104 = vpop.f32.mrf.mxu0
  %1105 = vmatprep.mubr.f32.mxu0 0.0
  %1106 = vmatmul.mubr.f32.gmra.mxu0 %v971
  %v1107 = vpop.f32.mrf.mxu0
  %v1108 = vadd.f32 %v979, %v1107
  %v1109 = vpop.f32.mrf.mxu0
  %1110 = vmatprep.mubr.f32.mxu0 0.0
  %1111 = vmatmul.mubr.f32.gmra.mxu0 %v972
  %v1112 = vpop.f32.mrf.mxu0
  %v1113 = vadd.f32 %v979, %v1112
  %v1114 = vpop.f32.mrf.mxu0
  %1115 = vmatprep.mubr.f32.mxu0 0.0
  %1116 = vmatmul.mubr.f32.gmra.mxu0 %v973
  %v1117 = vpop.f32.mrf.mxu0
  %v1118 = vadd.f32 %v979, %v1117
  %v1119 = vpop.f32.mrf.mxu0
  %1120 = vmatprep.mubr.f32.mxu0 0.0
  %1121 = vmatmul.mubr.f32.gmra.mxu0 %v974
  %v1122 = vpop.f32.mrf.mxu0
  %v1123 = vadd.f32 %v979, %v1122
  %v1124 = vpop.f32.mrf.mxu0
  %1125 = vdwg.mxu0
  %v1126 = vmax.f32 %v1048, 0.0
  %v1127 = vmax.f32 %v1053, 0.0
  %v1128 = vmax.f32 %v1058, 0.0
  %v1129 = vmax.f32 %v1063, 0.0
  %v1130 = vmax.f32 %v1068, 0.0
  %v1131 = vmax.f32 %v1073, 0.0
  %v1132 = vmax.f32 %v1078, 0.0
  %v1133 = vmax.f32 %v1083, 0.0
  %v1134 = vmax.f32 %v1088, 0.0
  %v1135 = vmax.f32 %v1093, 0.0
  %v1136 = vmax.f32 %v1098, 0.0
  %v1137 = vmax.f32 %v1103, 0.0
  %v1138 = vmax.f32 %v1108, 0.0
  %v1139 = vmax.f32 %v1113, 0.0
  %v1140 = vmax.f32 %v1118, 0.0
  %v1141 = vmax.f32 %v1123, 0.0
  %v1142 = vpack.c.bf16 %v1127, %v1126
  %v1143 = vpack.c.bf16 %v1129, %v1128
  %v1144 = vpack.c.bf16 %v1131, %v1130
  %v1145 = vpack.c.bf16 %v1133, %v1132
  %v1146 = vpack.c.bf16 %v1135, %v1134
  %v1147 = vpack.c.bf16 %v1137, %v1136
  %v1148 = vpack.c.bf16 %v1139, %v1138
  %v1149 = vpack.c.bf16 %v1141, %v1140
  %v1150 = vld [vmem:[%s8] sm:$0xff]
  %v1151 = vld [vmem:[%s8 + $0x8] sm:$0xff]
  %v1152 = vld [vmem:[%s8 + $0x10] sm:$0xff]
  %v1153 = vld [vmem:[%s8 + $0x18] sm:$0xff]
  %v1154 = vld [vmem:[%s8 + $0x20] sm:$0xff]
  %v1155 = vld [vmem:[%s8 + $0x28] sm:$0xff]
  %v1156 = vld [vmem:[%s8 + $0x30] sm:$0xff]
  %v1157 = vld [vmem:[%s8 + $0x38] sm:$0xff]
  %v1158 = vld [vmem:[%s8 + $0x40] sm:$0xff]
  %v1159 = vld [vmem:[%s8 + $0x48] sm:$0xff]
  %v1160 = vld [vmem:[%s8 + $0x50] sm:$0xff]
  %v1161 = vld [vmem:[%s8 + $0x58] sm:$0xff]
  %v1162 = vld [vmem:[%s8 + $0x60] sm:$0xff]
  %v1163 = vld [vmem:[%s8 + $0x68] sm:$0xff]
  %v1164 = vld [vmem:[%s8 + $0x70] sm:$0xff]
  %v1165 = vld [vmem:[%s8 + $0x78] sm:$0xff]
  %v1166 = vld [vmem:[%s9] sm:$0x1]
  %v1167 = vmul.bf16 %v1142, %v838
  %v1168 = vmul.bf16 %v1143, %v839
  %v1169 = vmul.bf16 %v1144, %v840
  %v1170 = vmul.bf16 %v1145, %v841
  %v1171 = vmul.bf16 %v1146, %v842
  %v1172 = vmul.bf16 %v1147, %v843
  %v1173 = vmul.bf16 %v1148, %v844
  %v1174 = vmul.bf16 %v1149, %v845
  %1175 = vmatprep.subr.bf16.mxu0 0
  %1176 = vmatpush1.bf16.msra.mxu0 %v1174
  %1177 = vmatprep.subr.bf16.mxu0 0
  %1178 = vmatpush1.bf16.msra.mxu0 %v1173
  %1179 = vmatprep.subr.bf16.mxu0 0
  %1180 = vmatpush1.bf16.msra.mxu0 %v1172
  %1181 = vmatprep.subr.bf16.mxu0 0
  %1182 = vmatpush1.bf16.msra.mxu0 %v1171
  %1183 = vmatprep.subr.bf16.mxu0 0
  %1184 = vmatpush1.bf16.msra.mxu0 %v1170
  %1185 = vmatprep.subr.bf16.mxu0 0
  %1186 = vmatpush1.bf16.msra.mxu0 %v1169
  %1187 = vmatprep.subr.bf16.mxu0 0
  %1188 = vmatpush1.bf16.msra.mxu0 %v1168
  %1189 = vmatprep.subr.bf16.mxu0 0
  %1190 = vmatpush1.bf16.msra.mxu0 %v1167
  %1191 = vmatprep.subr.bf16.mxu0 0
  %1192 = vmatpush2.bf16.msra.mxu0 0
  %1193 = vmatprep.subr.bf16.mxu0 0
  %1194 = vmatpush2.bf16.msra.mxu0 0
  %1195 = vmatprep.subr.bf16.mxu0 0
  %1196 = vmatpush2.bf16.msra.mxu0 0
  %1197 = vmatprep.subr.bf16.mxu0 0
  %1198 = vmatpush2.bf16.msra.mxu0 0
  %1199 = vmatprep.subr.bf16.mxu0 0
  %1200 = vmatpush2.bf16.msra.mxu0 0
  %1201 = vmatprep.subr.bf16.mxu0 0
  %1202 = vmatpush2.bf16.msra.mxu0 0
  %1203 = vmatprep.subr.bf16.mxu0 0
  %1204 = vmatpush2.bf16.msra.mxu0 0
  %1205 = vmatprep.subr.bf16.mxu0 0
  %1206 = vmatpush2.bf16.msra.mxu0 0
  %1207 = vmatprep.mubr.bf16.mxu0 0
  %1208 = vmatmul.mubr.bf16.gmra.mxu0 %v357
  %v1209 = vpop.f32.mrf.mxu0
  %v1210 = vadd.f32 0.0, %v1209
  %v1211 = vpop.f32.mrf.mxu0
  %v1212 = vpop.f32.mrf.mxu0
  %v1213 = vadd.f32 0.0, %v1212
  %v1214 = vpop.f32.mrf.mxu0
  %1215 = vmatprep.mubr.bf16.mxu0 0
  %1216 = vmatmul.mubr.bf16.gmra.mxu0 %v358
  %v1217 = vpop.f32.mrf.mxu0
  %v1218 = vadd.f32 0.0, %v1217
  %v1219 = vpop.f32.mrf.mxu0
  %v1220 = vpop.f32.mrf.mxu0
  %v1221 = vadd.f32 0.0, %v1220
  %v1222 = vpop.f32.mrf.mxu0
  %1223 = vmatprep.mubr.bf16.mxu0 0
  %1224 = vmatmul.mubr.bf16.gmra.mxu0 %v359
  %v1225 = vpop.f32.mrf.mxu0
  %v1226 = vadd.f32 0.0, %v1225
  %v1227 = vpop.f32.mrf.mxu0
  %v1228 = vpop.f32.mrf.mxu0
  %v1229 = vadd.f32 0.0, %v1228
  %v1230 = vpop.f32.mrf.mxu0
  %1231 = vmatprep.mubr.bf16.mxu0 0
  %1232 = vmatmul.mubr.bf16.gmra.mxu0 %v360
  %v1233 = vpop.f32.mrf.mxu0
  %v1234 = vadd.f32 0.0, %v1233
  %v1235 = vpop.f32.mrf.mxu0
  %v1236 = vpop.f32.mrf.mxu0
  %v1237 = vadd.f32 0.0, %v1236
  %v1238 = vpop.f32.mrf.mxu0
  %1239 = vmatprep.mubr.bf16.mxu0 0
  %1240 = vmatmul.mubr.bf16.gmra.mxu0 %v361
  %v1241 = vpop.f32.mrf.mxu0
  %v1242 = vadd.f32 0.0, %v1241
  %v1243 = vpop.f32.mrf.mxu0
  %v1244 = vpop.f32.mrf.mxu0
  %v1245 = vadd.f32 0.0, %v1244
  %v1246 = vpop.f32.mrf.mxu0
  %1247 = vmatprep.mubr.bf16.mxu0 0
  %1248 = vmatmul.mubr.bf16.gmra.mxu0 %v362
  %v1249 = vpop.f32.mrf.mxu0
  %v1250 = vadd.f32 0.0, %v1249
  %v1251 = vpop.f32.mrf.mxu0
  %v1252 = vpop.f32.mrf.mxu0
  %v1253 = vadd.f32 0.0, %v1252
  %v1254 = vpop.f32.mrf.mxu0
  %1255 = vmatprep.mubr.bf16.mxu0 0
  %1256 = vmatmul.mubr.bf16.gmra.mxu0 %v363
  %v1257 = vpop.f32.mrf.mxu0
  %v1258 = vadd.f32 0.0, %v1257
  %v1259 = vpop.f32.mrf.mxu0
  %v1260 = vpop.f32.mrf.mxu0
  %v1261 = vadd.f32 0.0, %v1260
  %v1262 = vpop.f32.mrf.mxu0
  %1263 = vmatprep.mubr.bf16.mxu0 0
  %1264 = vmatmul.mubr.bf16.gmra.mxu0 %v364
  %v1265 = vpop.f32.mrf.mxu0
  %v1266 = vadd.f32 0.0, %v1265
  %v1267 = vpop.f32.mrf.mxu0
  %v1268 = vpop.f32.mrf.mxu0
  %v1269 = vadd.f32 0.0, %v1268
  %v1270 = vpop.f32.mrf.mxu0
  %1271 = vdwg.mxu0
  %v1272 = vmul.f32 %v1210, %v521
  %v1273 = vmul.f32 %v1213, %v526
  %v1274 = vmul.f32 %v1218, %v531
  %v1275 = vmul.f32 %v1221, %v536
  %v1276 = vmul.f32 %v1226, %v541
  %v1277 = vmul.f32 %v1229, %v546
  %v1278 = vmul.f32 %v1234, %v551
  %v1279 = vmul.f32 %v1237, %v556
  %v1280 = vmul.f32 %v1242, %v561
  %v1281 = vmul.f32 %v1245, %v566
  %v1282 = vmul.f32 %v1250, %v571
  %v1283 = vmul.f32 %v1253, %v576
  %v1284 = vmul.f32 %v1258, %v581
  %v1285 = vmul.f32 %v1261, %v586
  %v1286 = vmul.f32 %v1266, %v591
  %v1287 = vmul.f32 %v1269, %v596
  %v1289 = vlaneseq
  %v1290 = vshrl.u32 %v1289, 7
  %v1291 = vsub.s32 0, %v1290
  %v1292 = vrot.slane %v1166, %v1291
  %1294 = vmatprep.subr.mxu0 0.0
  %1295 = vmatpush1.msra.mxu0 %v1165
  %1296 = vmatprep.subr.mxu0 0.0
  %1297 = vmatpush1.msra.mxu0 %v1164
  %1298 = vmatprep.subr.mxu0 0.0
  %1299 = vmatpush1.msra.mxu0 %v1163
  %1300 = vmatprep.subr.mxu0 0.0
  %1301 = vmatpush1.msra.mxu0 %v1162
  %1302 = vmatprep.subr.mxu0 0.0
  %1303 = vmatpush1.msra.mxu0 %v1161
  %1304 = vmatprep.subr.mxu0 0.0
  %1305 = vmatpush1.msra.mxu0 %v1160
  %1306 = vmatprep.subr.mxu0 0.0
  %1307 = vmatpush1.msra.mxu0 %v1159
  %1308 = vmatprep.subr.mxu0 0.0
  %1309 = vmatpush1.msra.mxu0 %v1158
  %1310 = vmatprep.subr.mxu0 0.0
  %1311 = vmatpush1.msra.mxu0 %v1157
  %1312 = vmatprep.subr.mxu0 0.0
  %1313 = vmatpush1.msra.mxu0 %v1156
  %1314 = vmatprep.subr.mxu0 0.0
  %1315 = vmatpush1.msra.mxu0 %v1155
  %1316 = vmatprep.subr.mxu0 0.0
  %1317 = vmatpush1.msra.mxu0 %v1154
  %1318 = vmatprep.subr.mxu0 0.0
  %1319 = vmatpush1.msra.mxu0 %v1153
  %1320 = vmatprep.subr.mxu0 0.0
  %1321 = vmatpush1.msra.mxu0 %v1152
  %1322 = vmatprep.subr.mxu0 0.0
  %1323 = vmatpush1.msra.mxu0 %v1151
  %1324 = vmatprep.subr.mxu0 0.0
  %1325 = vmatpush1.msra.mxu0 %v1150
  %1326 = vmatprep.subr.mxu0 0.0
  %1327 = vmatpush2.msra.mxu0 0.0
  %1328 = vmatprep.subr.mxu0 0.0
  %1329 = vmatpush2.msra.mxu0 0.0
  %1330 = vmatprep.subr.mxu0 0.0
  %1331 = vmatpush2.msra.mxu0 0.0
  %1332 = vmatprep.subr.mxu0 0.0
  %1333 = vmatpush2.msra.mxu0 0.0
  %1334 = vmatprep.subr.mxu0 0.0
  %1335 = vmatpush2.msra.mxu0 0.0
  %1336 = vmatprep.subr.mxu0 0.0
  %1337 = vmatpush2.msra.mxu0 0.0
  %1338 = vmatprep.subr.mxu0 0.0
  %1339 = vmatpush2.msra.mxu0 0.0
  %1340 = vmatprep.subr.mxu0 0.0
  %1341 = vmatpush2.msra.mxu0 0.0
  %1342 = vmatprep.subr.mxu0 0.0
  %1343 = vmatpush2.msra.mxu0 0.0
  %1344 = vmatprep.subr.mxu0 0.0
  %1345 = vmatpush2.msra.mxu0 0.0
  %1346 = vmatprep.subr.mxu0 0.0
  %1347 = vmatpush2.msra.mxu0 0.0
  %1348 = vmatprep.subr.mxu0 0.0
  %1349 = vmatpush2.msra.mxu0 0.0
  %1350 = vmatprep.subr.mxu0 0.0
  %1351 = vmatpush2.msra.mxu0 0.0
  %1352 = vmatprep.subr.mxu0 0.0
  %1353 = vmatpush2.msra.mxu0 0.0
  %1354 = vmatprep.subr.mxu0 0.0
  %1355 = vmatpush2.msra.mxu0 0.0
  %1356 = vmatprep.subr.mxu0 0.0
  %1357 = vmatpush2.msra.mxu0 0.0
  %1358 = vmatprep.mubr.f32.mxu0 0.0
  %1359 = vmatmul.mubr.f32.gmra.mxu0 %v1272
  %v1360 = vpop.f32.mrf.mxu0
  %v1361 = vadd.f32 %v1292, %v1360
  %v1362 = vpop.f32.mrf.mxu0
  %1363 = vmatprep.mubr.f32.mxu0 0.0
  %1364 = vmatmul.mubr.f32.gmra.mxu0 %v1273
  %v1365 = vpop.f32.mrf.mxu0
  %v1366 = vadd.f32 %v1292, %v1365
  %v1367 = vpop.f32.mrf.mxu0
  %1368 = vmatprep.mubr.f32.mxu0 0.0
  %1369 = vmatmul.mubr.f32.gmra.mxu0 %v1274
  %v1370 = vpop.f32.mrf.mxu0
  %v1371 = vadd.f32 %v1292, %v1370
  %v1372 = vpop.f32.mrf.mxu0
  %1373 = vmatprep.mubr.f32.mxu0 0.0
  %1374 = vmatmul.mubr.f32.gmra.mxu0 %v1275
  %v1375 = vpop.f32.mrf.mxu0
  %v1376 = vadd.f32 %v1292, %v1375
  %v1377 = vpop.f32.mrf.mxu0
  %1378 = vmatprep.mubr.f32.mxu0 0.0
  %1379 = vmatmul.mubr.f32.gmra.mxu0 %v1276
  %v1380 = vpop.f32.mrf.mxu0
  %v1381 = vadd.f32 %v1292, %v1380
  %v1382 = vpop.f32.mrf.mxu0
  %1383 = vmatprep.mubr.f32.mxu0 0.0
  %1384 = vmatmul.mubr.f32.gmra.mxu0 %v1277
  %v1385 = vpop.f32.mrf.mxu0
  %v1386 = vadd.f32 %v1292, %v1385
  %v1387 = vpop.f32.mrf.mxu0
  %1388 = vmatprep.mubr.f32.mxu0 0.0
  %1389 = vmatmul.mubr.f32.gmra.mxu0 %v1278
  %v1390 = vpop.f32.mrf.mxu0
  %v1391 = vadd.f32 %v1292, %v1390
  %v1392 = vpop.f32.mrf.mxu0
  %1393 = vmatprep.mubr.f32.mxu0 0.0
  %1394 = vmatmul.mubr.f32.gmra.mxu0 %v1279
  %v1395 = vpop.f32.mrf.mxu0
  %v1396 = vadd.f32 %v1292, %v1395
  %v1397 = vpop.f32.mrf.mxu0
  %1398 = vmatprep.mubr.f32.mxu0 0.0
  %1399 = vmatmul.mubr.f32.gmra.mxu0 %v1280
  %v1400 = vpop.f32.mrf.mxu0
  %v1401 = vadd.f32 %v1292, %v1400
  %v1402 = vpop.f32.mrf.mxu0
  %1403 = vmatprep.mubr.f32.mxu0 0.0
  %1404 = vmatmul.mubr.f32.gmra.mxu0 %v1281
  %v1405 = vpop.f32.mrf.mxu0
  %v1406 = vadd.f32 %v1292, %v1405
  %v1407 = vpop.f32.mrf.mxu0
  %1408 = vmatprep.mubr.f32.mxu0 0.0
  %1409 = vmatmul.mubr.f32.gmra.mxu0 %v1282
  %v1410 = vpop.f32.mrf.mxu0
  %v1411 = vadd.f32 %v1292, %v1410
  %v1412 = vpop.f32.mrf.mxu0
  %1413 = vmatprep.mubr.f32.mxu0 0.0
  %1414 = vmatmul.mubr.f32.gmra.mxu0 %v1283
  %v1415 = vpop.f32.mrf.mxu0
  %v1416 = vadd.f32 %v1292, %v1415
  %v1417 = vpop.f32.mrf.mxu0
  %1418 = vmatprep.mubr.f32.mxu0 0.0
  %1419 = vmatmul.mubr.f32.gmra.mxu0 %v1284
  %v1420 = vpop.f32.mrf.mxu0
  %v1421 = vadd.f32 %v1292, %v1420
  %v1422 = vpop.f32.mrf.mxu0
  %1423 = vmatprep.mubr.f32.mxu0 0.0
  %1424 = vmatmul.mubr.f32.gmra.mxu0 %v1285
  %v1425 = vpop.f32.mrf.mxu0
  %v1426 = vadd.f32 %v1292, %v1425
  %v1427 = vpop.f32.mrf.mxu0
  %1428 = vmatprep.mubr.f32.mxu0 0.0
  %1429 = vmatmul.mubr.f32.gmra.mxu0 %v1286
  %v1430 = vpop.f32.mrf.mxu0
  %v1431 = vadd.f32 %v1292, %v1430
  %v1432 = vpop.f32.mrf.mxu0
  %1433 = vmatprep.mubr.f32.mxu0 0.0
  %1434 = vmatmul.mubr.f32.gmra.mxu0 %v1287
  %v1435 = vpop.f32.mrf.mxu0
  %v1436 = vadd.f32 %v1292, %v1435
  %v1437 = vpop.f32.mrf.mxu0
  %1438 = vdwg.mxu0
  %1439 = vst [vmem:[%s10] sm:$0xff] %v1361
  %1440 = vst [vmem:[%s10 + $0x8] sm:$0xff] %v1366
  %1441 = vst [vmem:[%s10 + $0x10] sm:$0xff] %v1371
  %1442 = vst [vmem:[%s10 + $0x18] sm:$0xff] %v1376
  %1443 = vst [vmem:[%s10 + $0x20] sm:$0xff] %v1381
  %1444 = vst [vmem:[%s10 + $0x28] sm:$0xff] %v1386
  %1445 = vst [vmem:[%s10 + $0x30] sm:$0xff] %v1391
  %1446 = vst [vmem:[%s10 + $0x38] sm:$0xff] %v1396
  %1447 = vst [vmem:[%s10 + $0x40] sm:$0xff] %v1401
  %1448 = vst [vmem:[%s10 + $0x48] sm:$0xff] %v1406
  %1449 = vst [vmem:[%s10 + $0x50] sm:$0xff] %v1411
  %1450 = vst [vmem:[%s10 + $0x58] sm:$0xff] %v1416
  %1451 = vst [vmem:[%s10 + $0x60] sm:$0xff] %v1421
  %1452 = vst [vmem:[%s10 + $0x68] sm:$0xff] %v1426
  %1453 = vst [vmem:[%s10 + $0x70] sm:$0xff] %v1431
  %1454 = vst [vmem:[%s10 + $0x78] sm:$0xff] %v1436
  // Predicated region
  $region42: #{gcn_forward.1} parent=0 // pred_check
    _
  $region43: #{gcn_forward.1} parent=0 // pred_check_branch
    %1456 = sbr.rel (0) target = $region45
  $region44: #{gcn_forward.1} parent=0 // pred_region
    _
  $region45: #{gcn_forward.1} parent=0 // pred_fallthru
    _
  // Predicated region
  $region46: #{gcn_forward.1} parent=0 // pred_check
    _
  $region47: #{gcn_forward.1} parent=0 // pred_check_branch
    %1458 = sbr.rel (0) target = $region49
  $region48: #{gcn_forward.1} parent=0 // pred_region
    _
  $region49: #{gcn_forward.1} parent=0 // pred_fallthru
    _

</llo_original>
